<compile_context>
chip_gen: v5e
topology: v5e:2x2
jax: 0.10.0
libtpu: 0.0.40
codegen_flags: <defaults>
</compile_context>

<pallas_src>
import functools

import jax
import jax.numpy as jnp
from jax import lax
from jax.experimental import pallas as pl
from jax.experimental.pallas import tpu as pltpu


def _round_up(x, m):
    return ((x + m - 1) // m) * m


def _dilated_conv2d_kernel(w_ref, b_ref, x_ref, o_ref, rhs_ref, *, k, dil, wp,
                           lpad, cin):
    # w_ref  : VMEM f32[Cout_pad, K*K*Cin]  dense weight tile (tap-major columns)
    # b_ref  : VMEM f32[Cout_pad, 1]
    # x_ref  : VMEM f32[Cin, Lin_pad]       flat padded frames of one batch elem
    # o_ref  : VMEM f32[Cout_pad, Lpad]     flat output (stride-Wp rows; pad cols
    #                                       and pad channels sliced off outside)
    # rhs_ref: VMEM f32[K*K*Cin, Lpad]      staged, lane-aligned shifted slabs
    for tap in range(k * k):                    # static unroll: K*K = 9 taps
        kh, kw = tap // k, tap % k
        off = kh * dil * wp + kw * dil          # static flat shift of this tap
        rhs_ref[tap * cin:(tap + 1) * cin, :] = x_ref[:, off:off + lpad]
    # One MXU matmul (contraction = K*K*Cin), default precision, f32 accumulation.
    acc = jnp.dot(w_ref[...], rhs_ref[...], preferred_element_type=jnp.float32)
    o_ref[...] = (acc + b_ref[...]).astype(o_ref.dtype)


def sep_conv2d_dilated(x, weight, bias, *, kernel, dilation):
    """Forward of Sep_Conv2d_dilated.

    x:      (B, C, T, H, W) float32   (C = in_dim_2d + in_dim_3d)
    weight: (Cout, Cin, K, K)         (Cout = out_dim_2d + out_dim_3d)
    bias:   (Cout,)
    returns (B, Cout, T, Ho, Wo)
    """
    b, c, t, h, w = x.shape
    cout, cin, k, _ = weight.shape
    assert cin == c and k == kernel
    d = dilation

    hp, wp = h + 2 * d, w + 2 * d                 # padded spatial dims
    ho, wo = hp - d * (k - 1), wp - d * (k - 1)   # stride-1 output dims
    lout = t * hp * wp                            # flat valid extent per batch elem
    lpad = _round_up(lout, 128)                   # lane-aligned output extent
    max_off = d * (k - 1) * wp + d * (k - 1)      # largest flat tap shift
    lin_pad = _round_up(lpad + max_off, 128)      # lane-aligned input extent

    # Conv zero-border pad + flatten + zero tail (tap-shift slack & lane pad).
    xpad = jnp.pad(x, ((0, 0), (0, 0), (0, 0), (d, d), (d, d)))
    xflat = xpad.reshape(b, c, lout)
    xflat = jnp.pad(xflat, ((0, 0), (0, 0), (0, lin_pad - lout)))

    # Weights: (Cout, Cin, K, K) -> (Cout, K, K, Cin) -> (Cout, K*K*Cin) so that
    # column tap*Cin + ci matches rhs row tap*Cin + ci; pad Cout -> multiple of 8.
    cout_pad = _round_up(cout, 8)
    kkcin = k * k * cin
    wmat = jnp.transpose(weight, (0, 2, 3, 1)).reshape(cout, kkcin)
    wmat = jnp.pad(wmat.astype(jnp.float32), ((0, cout_pad - cout), (0, 0)))
    bcol = jnp.pad(bias.astype(jnp.float32), (0, cout_pad - cout))
    bcol = bcol.reshape(cout_pad, 1)

    kern = functools.partial(_dilated_conv2d_kernel,
                             k=k, dil=d, wp=wp, lpad=lpad, cin=cin)

    out_flat = pl.pallas_call(
        kern,
        out_shape=jax.ShapeDtypeStruct((b, cout_pad, lpad), x.dtype),
        grid=(b,),
        in_specs=[
            pl.BlockSpec((cout_pad, kkcin), lambda i: (0, 0)),      # weights (VMEM)
            pl.BlockSpec((cout_pad, 1), lambda i: (0, 0)),          # bias    (VMEM)
            pl.BlockSpec((None, cin, lin_pad), lambda i: (i, 0, 0)),  # one batch elem
        ],
        out_specs=pl.BlockSpec((None, cout_pad, lpad), lambda i: (i, 0, 0)),
        scratch_shapes=[pltpu.VMEM((kkcin, lpad), jnp.float32)],
        compiler_params=pltpu.CompilerParams(
            dimension_semantics=("parallel",),
            vmem_limit_bytes=32 * 1024 * 1024),
    )(wmat, bcol, xflat)

    # Drop pad channels / lane pad, then carve the valid (Ho, Wo) window out of
    # each stride-(Hp, Wp) flat frame.
    out = out_flat[:, :cout, :lout].reshape(b, cout, t, hp, wp)[:, :, :, :ho, :wo]
    return out


if __name__ == "__main__":
    key = jax.random.PRNGKey(0)

    # Module hyper-params (small, consistent with the __init__ signature):
    in_dim_2d, in_dim_3d = 2, 2          # Cin = 4
    out_dim_2d, out_dim_3d = 3, 3        # Cout = 6
    K, DIL = 3, 2                        # kernel=3, dilation=2, padding=dilation
    B, T, H, W = 2, 4, 16, 16
    Cin = in_dim_2d + in_dim_3d
    Cout = out_dim_2d + out_dim_3d

    kx, kw_, kb = jax.random.split(key, 3)
    x = jax.random.normal(kx, (B, Cin, T, H, W), dtype=jnp.float32)
    # Deterministic synthetic parameter init (shapes from nn.Conv2d in __init__).
    fan_in = Cin * K * K
    weight = jax.random.normal(kw_, (Cout, Cin, K, K), dtype=jnp.float32) / jnp.sqrt(fan_in)
    bias = 0.01 * jax.random.normal(kb, (Cout,), dtype=jnp.float32)

    out = sep_conv2d_dilated(x, weight, bias, kernel=K, dilation=DIL)
    out = jax.block_until_ready(out)

    # Pure-JAX reference for correctness (HIGHEST precision).  The kernel uses
    # default MXU precision (single bf16 pass, f32 accumulation) per the perf
    # review, so the tolerance is deliberately loosened vs. the 1e-3 of v2.
    x2d = jnp.transpose(x, (0, 2, 1, 3, 4)).reshape(B * T, Cin, H, W)
    ref2d = lax.conv_general_dilated(
        x2d, weight, window_strides=(1, 1),
        padding=[(DIL, DIL), (DIL, DIL)], rhs_dilation=(DIL, DIL),
        dimension_numbers=("NCHW", "OIHW", "NCHW"),
        precision=lax.Precision.HIGHEST)
    ref2d = ref2d + bias[None, :, None, None]
    ref = jnp.transpose(ref2d.reshape(B, T, Cout, H, W), (0, 2, 1, 3, 4))

    assert out.shape == (B, Cout, T, H, W), out.shape
    assert jnp.allclose(out, ref, atol=3e-2, rtol=3e-2), (
        "mismatch vs reference conv; max abs diff = "
        f"{float(jnp.max(jnp.abs(out - ref)))}")
    print("KERNEL_OK")
</pallas_src>

<mosaic_0001>
module attributes {stable_mosaic.version = 11 : i64} {
  func.func @_dilated_conv2d_kernel(%arg0: i32, %arg1: memref<8x36xf32, #tpu.memory_space<vmem>>, %arg2: memref<8x1xf32, #tpu.memory_space<vmem>>, %arg3: memref<1x4x1792xf32, #tpu.memory_space<vmem>>, %arg4: memref<1x8x1664xf32, #tpu.memory_space<vmem>>, %arg5: memref<36x1664xf32, #tpu.memory_space<vmem>>) attributes {dimension_semantics = [#tpu.dimension_semantics<parallel>], iteration_bounds = array<i64: 2>, scalar_prefetch = 0 : i64, scratch_operands = 1 : i64, tpu.core_type = #tpu.core_type<tc>, window_params = [{pipeline_mode = #tpu.pipeline_mode<synchronous>, transform_indices = @transform_0, window_bounds = array<i64: 8, 36>}, {pipeline_mode = #tpu.pipeline_mode<synchronous>, transform_indices = @transform_1, window_bounds = array<i64: 8, 1>}, {transform_indices = @transform_2, window_bounds = array<i64: 1, 4, 1792>}, {transform_indices = @transform_3, window_bounds = array<i64: 1, 8, 1664>}]} {
    %c0 = arith.constant 0 : index
    %c0_0 = arith.constant 0 : index
    %c0_1 = arith.constant 0 : index
    %0 = vector.load %arg3[%c0, %c0_0, %c0_1] : memref<1x4x1792xf32, #tpu.memory_space<vmem>>, vector<1x4x1664xf32>
    %1 = vector.shape_cast %0 : vector<1x4x1664xf32> to vector<4x1664xf32>
    %c0_2 = arith.constant 0 : index
    %c0_3 = arith.constant 0 : index
    %2 = vector.load %arg5[%c0_2, %c0_3] : memref<36x1664xf32, #tpu.memory_space<vmem>>, vector<4x1664xf32>
    tpu.vector_store %arg5[%c0_2, %c0_3], %1 {strides = array<i32>} : memref<36x1664xf32, #tpu.memory_space<vmem>>, vector<4x1664xf32>,
    %c0_4 = arith.constant 0 : index
    %c0_5 = arith.constant 0 : index
    %c2 = arith.constant 2 : index
    %3 = vector.load %arg3[%c0_4, %c0_5, %c2] : memref<1x4x1792xf32, #tpu.memory_space<vmem>>, vector<1x4x1664xf32>
    %4 = vector.shape_cast %3 : vector<1x4x1664xf32> to vector<4x1664xf32>
    %c4 = arith.constant 4 : index
    %c0_6 = arith.constant 0 : index
    %5 = vector.load %arg5[%c4, %c0_6] : memref<36x1664xf32, #tpu.memory_space<vmem>>, vector<4x1664xf32>
    tpu.vector_store %arg5[%c4, %c0_6], %4 {strides = array<i32>} : memref<36x1664xf32, #tpu.memory_space<vmem>>, vector<4x1664xf32>,
    %c0_7 = arith.constant 0 : index
    %c0_8 = arith.constant 0 : index
    %c4_9 = arith.constant 4 : index
    %6 = vector.load %arg3[%c0_7, %c0_8, %c4_9] : memref<1x4x1792xf32, #tpu.memory_space<vmem>>, vector<1x4x1664xf32>
    %7 = vector.shape_cast %6 : vector<1x4x1664xf32> to vector<4x1664xf32>
    %c8 = arith.constant 8 : index
    %c0_10 = arith.constant 0 : index
    %8 = vector.load %arg5[%c8, %c0_10] : memref<36x1664xf32, #tpu.memory_space<vmem>>, vector<4x1664xf32>
    tpu.vector_store %arg5[%c8, %c0_10], %7 {strides = array<i32>} : memref<36x1664xf32, #tpu.memory_space<vmem>>, vector<4x1664xf32>,
    %c0_11 = arith.constant 0 : index
    %c0_12 = arith.constant 0 : index
    %c40 = arith.constant 40 : index
    %9 = vector.load %arg3[%c0_11, %c0_12, %c40] : memref<1x4x1792xf32, #tpu.memory_space<vmem>>, vector<1x4x1664xf32>
    %10 = vector.shape_cast %9 : vector<1x4x1664xf32> to vector<4x1664xf32>
    %c12 = arith.constant 12 : index
    %c0_13 = arith.constant 0 : index
    %11 = vector.load %arg5[%c12, %c0_13] : memref<36x1664xf32, #tpu.memory_space<vmem>>, vector<4x1664xf32>
    tpu.vector_store %arg5[%c12, %c0_13], %10 {strides = array<i32>} : memref<36x1664xf32, #tpu.memory_space<vmem>>, vector<4x1664xf32>,
    %c0_14 = arith.constant 0 : index
    %c0_15 = arith.constant 0 : index
    %c42 = arith.constant 42 : index
    %12 = vector.load %arg3[%c0_14, %c0_15, %c42] : memref<1x4x1792xf32, #tpu.memory_space<vmem>>, vector<1x4x1664xf32>
    %13 = vector.shape_cast %12 : vector<1x4x1664xf32> to vector<4x1664xf32>
    %c16 = arith.constant 16 : index
    %c0_16 = arith.constant 0 : index
    %14 = vector.load %arg5[%c16, %c0_16] : memref<36x1664xf32, #tpu.memory_space<vmem>>, vector<4x1664xf32>
    tpu.vector_store %arg5[%c16, %c0_16], %13 {strides = array<i32>} : memref<36x1664xf32, #tpu.memory_space<vmem>>, vector<4x1664xf32>,
    %c0_17 = arith.constant 0 : index
    %c0_18 = arith.constant 0 : index
    %c44 = arith.constant 44 : index
    %15 = vector.load %arg3[%c0_17, %c0_18, %c44] : memref<1x4x1792xf32, #tpu.memory_space<vmem>>, vector<1x4x1664xf32>
    %16 = vector.shape_cast %15 : vector<1x4x1664xf32> to vector<4x1664xf32>
    %c20 = arith.constant 20 : index
    %c0_19 = arith.constant 0 : index
    %17 = vector.load %arg5[%c20, %c0_19] : memref<36x1664xf32, #tpu.memory_space<vmem>>, vector<4x1664xf32>
    tpu.vector_store %arg5[%c20, %c0_19], %16 {strides = array<i32>} : memref<36x1664xf32, #tpu.memory_space<vmem>>, vector<4x1664xf32>,
    %c0_20 = arith.constant 0 : index
    %c0_21 = arith.constant 0 : index
    %c80 = arith.constant 80 : index
    %18 = vector.load %arg3[%c0_20, %c0_21, %c80] : memref<1x4x1792xf32, #tpu.memory_space<vmem>>, vector<1x4x1664xf32>
    %19 = vector.shape_cast %18 : vector<1x4x1664xf32> to vector<4x1664xf32>
    %c24 = arith.constant 24 : index
    %c0_22 = arith.constant 0 : index
    %20 = vector.load %arg5[%c24, %c0_22] : memref<36x1664xf32, #tpu.memory_space<vmem>>, vector<4x1664xf32>
    tpu.vector_store %arg5[%c24, %c0_22], %19 {strides = array<i32>} : memref<36x1664xf32, #tpu.memory_space<vmem>>, vector<4x1664xf32>,
    %c0_23 = arith.constant 0 : index
    %c0_24 = arith.constant 0 : index
    %c82 = arith.constant 82 : index
    %21 = vector.load %arg3[%c0_23, %c0_24, %c82] : memref<1x4x1792xf32, #tpu.memory_space<vmem>>, vector<1x4x1664xf32>
    %22 = vector.shape_cast %21 : vector<1x4x1664xf32> to vector<4x1664xf32>
    %c28 = arith.constant 28 : index
    %c0_25 = arith.constant 0 : index
    %23 = vector.load %arg5[%c28, %c0_25] : memref<36x1664xf32, #tpu.memory_space<vmem>>, vector<4x1664xf32>
    tpu.vector_store %arg5[%c28, %c0_25], %22 {strides = array<i32>} : memref<36x1664xf32, #tpu.memory_space<vmem>>, vector<4x1664xf32>,
    %c0_26 = arith.constant 0 : index
    %c0_27 = arith.constant 0 : index
    %c84 = arith.constant 84 : index
    %24 = vector.load %arg3[%c0_26, %c0_27, %c84] : memref<1x4x1792xf32, #tpu.memory_space<vmem>>, vector<1x4x1664xf32>
    %25 = vector.shape_cast %24 : vector<1x4x1664xf32> to vector<4x1664xf32>
    %c32 = arith.constant 32 : index
    %c0_28 = arith.constant 0 : index
    %26 = vector.load %arg5[%c32, %c0_28] : memref<36x1664xf32, #tpu.memory_space<vmem>>, vector<4x1664xf32>
    tpu.vector_store %arg5[%c32, %c0_28], %25 {strides = array<i32>} : memref<36x1664xf32, #tpu.memory_space<vmem>>, vector<4x1664xf32>,
    %c0_29 = arith.constant 0 : index
    %c0_30 = arith.constant 0 : index
    %27 = vector.load %arg1[%c0_29, %c0_30] : memref<8x36xf32, #tpu.memory_space<vmem>>, vector<8x36xf32>
    %c0_31 = arith.constant 0 : index
    %c0_32 = arith.constant 0 : index
    %28 = vector.load %arg5[%c0_31, %c0_32] : memref<36x1664xf32, #tpu.memory_space<vmem>>, vector<36x1664xf32>
    %cst = arith.constant dense<0.000000e+00> : vector<8x1664xf32>
    %29 = tpu.matmul %27, %28, %cst {dimension_numbers = #tpu.dot_dimension_numbers<[1], [0], [0], [1], [0, 0, 1, 1], [], []>} : vector<8x36xf32>, vector<36x1664xf32>, vector<8x1664xf32> -> vector<8x1664xf32>
    %c0_33 = arith.constant 0 : index
    %c0_34 = arith.constant 0 : index
    %30 = vector.load %arg2[%c0_33, %c0_34] : memref<8x1xf32, #tpu.memory_space<vmem>>, vector<8x1xf32>
    %31 = vector.broadcast %30 : vector<8x1xf32> to vector<8x1664xf32>
    %32 = arith.addf %29, %31 : vector<8x1664xf32>
    %c0_35 = arith.constant 0 : index
    %c0_36 = arith.constant 0 : index
    %c0_37 = arith.constant 0 : index
    %33 = vector.load %arg4[%c0_35, %c0_36, %c0_37] : memref<1x8x1664xf32, #tpu.memory_space<vmem>>, vector<1x8x1664xf32>
    %34 = vector.shape_cast %33 : vector<1x8x1664xf32> to vector<8x1664xf32>
    %35 = vector.shape_cast %32 : vector<8x1664xf32> to vector<1x8x1664xf32>
    tpu.vector_store %arg4[%c0_35, %c0_36, %c0_37], %35 {strides = array<i32>} : memref<1x8x1664xf32, #tpu.memory_space<vmem>>, vector<1x8x1664xf32>,
    return
  }
  func.func @transform_0(%arg0: i32) -> (i32, i32) {
    %c0_i32 = arith.constant 0 : i32
    %c0_i32_0 = arith.constant 0 : i32
    %c0_i32_1 = arith.constant 0 : i32
    return %c0_i32, %c0_i32_0 : i32, i32
  }
  func.func @transform_1(%arg0: i32) -> (i32, i32) {
    %c0_i32 = arith.constant 0 : i32
    %c0_i32_0 = arith.constant 0 : i32
    %c0_i32_1 = arith.constant 0 : i32
    return %c0_i32, %c0_i32_0 : i32, i32
  }
  func.func @transform_2(%arg0: i32) -> (i32, i32, i32) {
    %c0_i32 = arith.constant 0 : i32
    %c0_i32_0 = arith.constant 0 : i32
    %c0_i32_1 = arith.constant 0 : i32
    return %arg0, %c0_i32, %c0_i32_0 : i32, i32, i32
  }
  func.func @transform_3(%arg0: i32) -> (i32, i32, i32) {
    %c0_i32 = arith.constant 0 : i32
    %c0_i32_0 = arith.constant 0 : i32
    %c0_i32_1 = arith.constant 0 : i32
    return %arg0, %c0_i32, %c0_i32_0 : i32, i32, i32
  }
}

</mosaic_0001>

<llo_original>
// kernel: tpu_custom_call.1
$region0: #{tpu_custom_call.1}
  #allocation0 [shape = 'u32[]', space=smem, size = 0x4, offset = 0x4, fixed_abs, tag = 'smem constant byte address 0x4 - core index']
  #allocation1 [shape = 'u32[72,128]{1,0:T(1,128)}', space=vmem, size = 0x9000, scoped, tag = 'internal scratch']
  #allocation2 [shape = 'f32[36,1664]{1,0:T(8,128)}', space=vmem, size = 0x41000, scoped, tag = 'scratch operand']
  %s0 = inlined_call_operand.vmem [shape: f32[8,36], index: 0, kind: input, shape index: {}]
  %s1 = inlined_call_operand.vmem [shape: f32[8,1], index: 1, kind: input, shape index: {}]
  %s2 = inlined_call_operand.hbm [shape: f32[2,4,1792], index: 2, kind: input, shape index: {}]
  %s3 = inlined_call_operand.hbm [shape: f32[2,8,1664], index: 3, kind: output, shape index: {}]
  %s4 = sld [smem:[#allocation0]]
  $region49: #{tpu_custom_call.1} parent=0
    _
  %s6 = ssub.s32 1, %s4
  %s7 = scalar_select 0, %s6, %s4
  $region1: #{tpu_custom_call.1} parent=0
    #allocation3 [shape = 'u8[57344]{0}', space=vmem, size = 0xe000, scoped, tag = 'input window, operand 2']
    #allocation4 [shape = 's32[2]{0}', space=sflag, size = 0x8, scoped, tag = 'scoped memory for tpu_custom_call.1']
    #allocation5 [shape = 's32[2]{0}', space=sflag, size = 0x8, scoped, tag = 'scoped memory for tpu_custom_call.1']
    #allocation6 [shape = 'u8[106496]{0}', space=vmem, size = 0x1a000, scoped, tag = 'output window, operand 0']
    %8 = vsyncpa [#allocation4], 0
    %s9 = scalar_lea.sflag [#allocation4], 1
    %10 = vsyncpa %s9, 0
    %11 = vsyncpa [#allocation5], 0
    %s12 = scalar_lea.sflag [#allocation5], 1
    %13 = vsyncpa %s12, 0
    loop: start=0, step=1, limit=4
    $region2: #{tpu_custom_call.1} parent=1 // loop_pre_header
      _
    $region3: #{tpu_custom_call.1} parent=1 // loop_header
      %s15 = sphi 0, %s19
      %p16 = scmp.ge.s32.totalorder %s15, 4
      %s23 = sphi 0, %s23
      %s25 = sphi 0, %s23
      %s26 = sphi 0, %s25
      %s40 = sphi 0, %s26
      %s44 = sphi 0, %s44
      %s46 = sphi 0, %s44
      %s47 = sphi 0, %s46
      %s61 = sphi 0, %s47
      %s67 = sphi 0, %s69
      %s70 = sphi 0, %s67
      %s71 = sphi 0, %s70
      %s87 = sphi 0, %s71
      %s93 = sphi 0, %s95
      %s96 = sphi 0, %s93
      %s97 = sphi 0, %s96
      %s113 = sphi 0, %s97
    $region4: #{tpu_custom_call.1} parent=1 // loop_header_branch
      %18 = sbr.rel (%p16) target = $region8
    $region5: #{tpu_custom_call.1} parent=1 // loop_body
      %s20 = ssub.s32 %s15, 1
      %s21 = ssub.s32 %s15, 2
      %s22 = sadd.s32 %s15, 1
      %s24 = sadd.s32 %s23, 1
      %p27 = scmp.eq.s32.totalorder %s15, 1
      %p28 = scmp.ne.s32.totalorder %s23, %s25
      %p29 = scmp.eq.s32.totalorder %s15, 0
      %p30 = por %p28, %p29
      %p31 = scmp.ne.s32.totalorder %s23, %s25
      %p32 = scmp.eq.s32.totalorder %s20, 1
      %p33 = por %p31, %p32
      %p34 = scmp.ne.s32.totalorder %s25, %s26
      %p35 = scmp.eq.s32.totalorder %s20, 0
      %p36 = por %p34, %p35
      %p37 = scmp.ne.s32.totalorder %s25, %s26
      %p38 = scmp.eq.s32.totalorder %s21, 1
      %p39 = por %p37, %p38
      %p41 = scmp.ne.s32.totalorder %s26, %s40
      %p42 = scmp.eq.s32.totalorder %s21, 0
      %p43 = por %p41, %p42
      %s45 = sadd.s32 %s44, 1
      %p48 = scmp.eq.s32.totalorder %s15, 1
      %p49 = scmp.ne.s32.totalorder %s44, %s46
      %p50 = scmp.eq.s32.totalorder %s15, 0
      %p51 = por %p49, %p50
      %p52 = scmp.ne.s32.totalorder %s44, %s46
      %p53 = scmp.eq.s32.totalorder %s20, 1
      %p54 = por %p52, %p53
      %p55 = scmp.ne.s32.totalorder %s46, %s47
      %p56 = scmp.eq.s32.totalorder %s20, 0
      %p57 = por %p55, %p56
      %p58 = scmp.ne.s32.totalorder %s46, %s47
      %p59 = scmp.eq.s32.totalorder %s21, 1
      %p60 = por %p58, %p59
      %p62 = scmp.ne.s32.totalorder %s47, %s61
      %p63 = scmp.eq.s32.totalorder %s21, 0
      %p64 = por %p62, %p63
      %s65 = ssub.s32 %s15, %s22
      %p66 = scmp.eq.s32.totalorder %s65, 0
      %s68 = sadd.s32 %s67, 1
      %s69 = scalar_select %p66, %s67, %s68
      %p72 = pneg %p66
      %p73 = scmp.eq.s32.totalorder %s15, 1
      %p74 = por %p72, %p73
      %p75 = scmp.ne.s32.totalorder %s67, %s70
      %p76 = scmp.eq.s32.totalorder %s15, 0
      %p77 = por %p75, %p76
      %p78 = scmp.ne.s32.totalorder %s67, %s70
      %p79 = scmp.eq.s32.totalorder %s20, 1
      %p80 = por %p78, %p79
      %p81 = scmp.ne.s32.totalorder %s70, %s71
      %p82 = scmp.eq.s32.totalorder %s20, 0
      %p83 = por %p81, %p82
      %p84 = scmp.ne.s32.totalorder %s70, %s71
      %p85 = scmp.eq.s32.totalorder %s21, 1
      %p86 = por %p84, %p85
      %p88 = scmp.ne.s32.totalorder %s71, %s87
      %p89 = scmp.eq.s32.totalorder %s21, 0
      %p90 = por %p88, %p89
      %s91 = ssub.s32 %s15, %s22
      %p92 = scmp.eq.s32.totalorder %s91, 0
      %s94 = sadd.s32 %s93, 1
      %s95 = scalar_select %p92, %s93, %s94
      %p98 = pneg %p92
      %p99 = scmp.eq.s32.totalorder %s15, 1
      %p100 = por %p98, %p99
      %p101 = scmp.ne.s32.totalorder %s93, %s96
      %p102 = scmp.eq.s32.totalorder %s15, 0
      %p103 = por %p101, %p102
      %p104 = scmp.ne.s32.totalorder %s93, %s96
      %p105 = scmp.eq.s32.totalorder %s20, 1
      %p106 = por %p104, %p105
      %p107 = scmp.ne.s32.totalorder %s96, %s97
      %p108 = scmp.eq.s32.totalorder %s20, 0
      %p109 = por %p107, %p108
      %p110 = scmp.ne.s32.totalorder %s96, %s97
      %p111 = scmp.eq.s32.totalorder %s21, 1
      %p112 = por %p110, %p111
      %p114 = scmp.ne.s32.totalorder %s97, %s113
      %p115 = scmp.eq.s32.totalorder %s21, 0
      %p116 = por %p114, %p115
      %p117 = scmp.le.s32.totalorder 1, %s15
      %p118 = scmp.lt.s32.totalorder %s15, 3
      %p119 = pnand %p117, %p118
      %p120 = pneg %p119
      // Predicated region
      $region9: #{tpu_custom_call.1} parent=5 // pred_check
        _
      $region10: #{tpu_custom_call.1} parent=5 // pred_check_branch
        %122 = sbr.rel (%p119) target = $region12
      $region11: #{tpu_custom_call.1} parent=5 // pred_region
        %s123 = ssub.s32 %s15, 1
        // Predicated region
        $region13: #{tpu_custom_call.1} parent=11 // pred_check
          %p124 = pneg %p36
        $region14: #{tpu_custom_call.1} parent=11 // pred_check_branch
          %126 = sbr.rel (%p124) target = $region16
        $region15: #{tpu_custom_call.1} parent=11 // pred_region
          _
        $region16: #{tpu_custom_call.1} parent=11 // pred_fallthru
          _
        // Predicated region
        $region17: #{tpu_custom_call.1} parent=11 // pred_check
          %p127 = pneg %p57
        $region18: #{tpu_custom_call.1} parent=11 // pred_check_branch
          %129 = sbr.rel (%p127) target = $region20
        $region19: #{tpu_custom_call.1} parent=11 // pred_region
          _
        $region20: #{tpu_custom_call.1} parent=11 // pred_fallthru
          _
      $region12: #{tpu_custom_call.1} parent=5 // pred_fallthru
        _
      %p130 = scmp.lt.s32.totalorder %s15, 2
      // Predicated region
      $region21: #{tpu_custom_call.1} parent=5 // pred_check
        %p131 = pneg %p130
      $region22: #{tpu_custom_call.1} parent=5 // pred_check_branch
        %133 = sbr.rel (%p131) target = $region24
      $region23: #{tpu_custom_call.1} parent=5 // pred_region
        // Predicated region
        $region25: #{tpu_custom_call.1} parent=23 // pred_check
          %p134 = pneg %p77
        $region26: #{tpu_custom_call.1} parent=23 // pred_check_branch
          %136 = sbr.rel (%p134) target = $region28
        $region27: #{tpu_custom_call.1} parent=23 // pred_region
          %s137 = sand.u32 %s67, 1
          %s138 = scalar_lea.sflag [#allocation4], %s137
          %s139 = sand.u32 %s67, 1
          %s140 = smul.addr %s139, 56
          %s141 = scalar_lea.vmem [#allocation3], %s140
          %143 = vsyncadd %s138, 0
          %s144 = smul.addr %s15, 14
          %s145 = smul.addr %s144, 4
          %s146 = scalar_lea.hbm %s2, %s145
          %s148 = sshll.u32 %s146, 4
          %s149 = int_to_ptr.hbm [resolvable:$true] %s148
          %s150 = sshll.u32 %s141, 4
          %s151 = int_to_ptr.vmem [resolvable:$true] %s150
          %153 = dma.hbm_to_vmem [thread:$0]  %s149, 896, %s151, %s138
        $region28: #{tpu_custom_call.1} parent=23 // pred_fallthru
          _
      $region24: #{tpu_custom_call.1} parent=5 // pred_fallthru
        _
      %p154 = scmp.le.s32.totalorder 1, %s15
      %p155 = scmp.lt.s32.totalorder %s15, 3
      %p156 = pnand %p154, %p155
      %p157 = pneg %p156
      // Predicated region
      $region29: #{tpu_custom_call.1} parent=5 // pred_check
        _
      $region30: #{tpu_custom_call.1} parent=5 // pred_check_branch
        %159 = sbr.rel (%p156) target = $region32
      $region31: #{tpu_custom_call.1} parent=5 // pred_region
        %s160 = ssub.s32 %s15, 1
        %s161 = sand.u32 %s70, 1
        %s162 = scalar_lea.sflag [#allocation4], %s161
        %s163 = sand.u32 %s70, 1
        %s164 = smul.addr %s163, 56
        %s165 = scalar_lea.vmem [#allocation3], %s164
        // Predicated region
        $region33: #{tpu_custom_call.1} parent=31 // pred_check
          %p166 = pneg %p83
        $region34: #{tpu_custom_call.1} parent=31 // pred_check_branch
          %168 = sbr.rel (%p166) target = $region36
        $region35: #{tpu_custom_call.1} parent=31 // pred_region
          %170 = dma.done %s162, 896
        $region36: #{tpu_custom_call.1} parent=31 // pred_fallthru
          _
        %p171 = pneg %p36
        %p172 = pneg %p33
        %p173 = pneg %p57
        %p174 = pneg %p54
        %s175 = sand.u32 %s70, 1
        %s176 = scalar_lea.sflag [#allocation4], %s175
        %s177 = sand.u32 %s70, 1
        %s178 = smul.addr %s177, 56
        %s179 = scalar_lea.vmem [#allocation3], %s178
        %p180 = pneg %p83
        %p181 = pneg %p80
        %p182 = pneg %p109
        %p183 = pneg %p106
        %s184 = sand.u32 %s96, 1
        %s185 = scalar_lea.sflag [#allocation5], %s184
        %s186 = sand.u32 %s96, 1
        %s187 = smul.addr %s186, 104
        %s188 = scalar_lea.vmem [#allocation6], %s187
        %v189 = vld [vmem:[%s165] sm:$0xff]
        %v190 = vld [vmem:[%s165 + $0x8] sm:$0xff]
        %v191 = vld [vmem:[%s165 + $0x10] sm:$0xff]
        %v192 = vld [vmem:[%s165 + $0x18] sm:$0xff]
        %v193 = vld [vmem:[%s165 + $0x20] sm:$0xff]
        %v194 = vld [vmem:[%s165 + $0x28] sm:$0xff]
        %v195 = vld [vmem:[%s165 + $0x30] sm:$0xf]
        %203 = vst [vmem:[#allocation1] ss:$2 sm:$0xff] %v189
        %s204 = scalar_lea.vmem [#allocation1], 16
        %205 = vst [vmem:[%s204] ss:$2 sm:$0xff] %v190
        %s206 = scalar_lea.vmem [#allocation1], 32
        %207 = vst [vmem:[%s206] ss:$2 sm:$0xff] %v191
        %s208 = scalar_lea.vmem [#allocation1], 48
        %209 = vst [vmem:[%s208] ss:$2 sm:$0xff] %v192
        %v210 = vld.sshfl [vmem:[#allocation1] sm:$0xff pattern:$0x75316420]
        %v211 = vld.sshfl [vmem:[#allocation1 + $0x8] sm:$0xff pattern:$0x75316420]
        %v212 = vld.sshfl [vmem:[#allocation1 + $0x10] sm:$0xff pattern:$0x75316420]
        %v213 = vld.sshfl [vmem:[#allocation1 + $0x18] sm:$0xff pattern:$0x75316420]
        %v214 = vld.sshfl [vmem:[#allocation1 + $0x20] sm:$0xff pattern:$0x75316420]
        %v215 = vld.sshfl [vmem:[#allocation1 + $0x28] sm:$0xff pattern:$0x75316420]
        %v216 = vld.sshfl [vmem:[#allocation1 + $0x30] sm:$0xff pattern:$0x75316420]
        %v217 = vld.sshfl [vmem:[#allocation1 + $0x38] sm:$0xff pattern:$0x75316420]
        %218 = vst [vmem:[#allocation1] ss:$2 sm:$0xff] %v193
        %219 = vst [vmem:[%s204] ss:$2 sm:$0xff] %v194
        %220 = vst [vmem:[%s206] ss:$2 sm:$0xff] %v195
        %v221 = vld.sshfl [vmem:[#allocation1] sm:$0xff pattern:$0x75316420]
        %v222 = vld.sshfl [vmem:[#allocation1 + $0x8] sm:$0xff pattern:$0x75316420]
        %v223 = vld.sshfl [vmem:[#allocation1 + $0x10] sm:$0xff pattern:$0x75316420]
        %v224 = vld.sshfl [vmem:[#allocation1 + $0x18] sm:$0xff pattern:$0x75316420]
        %v225 = vld.sshfl [vmem:[#allocation1 + $0x20] sm:$0xff pattern:$0x75316420]
        %239 = vst [vmem:[#allocation2] sm:$0xf] %v210
        %240 = vst [vmem:[#allocation2 + $0x8] sm:$0xf] %v211
        %241 = vst [vmem:[#allocation2 + $0x10] sm:$0xf] %v212
        %242 = vst [vmem:[#allocation2 + $0x18] sm:$0xf] %v213
        %243 = vst [vmem:[#allocation2 + $0x20] sm:$0xf] %v214
        %244 = vst [vmem:[#allocation2 + $0x28] sm:$0xf] %v215
        %245 = vst [vmem:[#allocation2 + $0x30] sm:$0xf] %v216
        %246 = vst [vmem:[#allocation2 + $0x38] sm:$0xf] %v217
        %247 = vst [vmem:[#allocation2 + $0x40] sm:$0xf] %v221
        %248 = vst [vmem:[#allocation2 + $0x48] sm:$0xf] %v222
        %249 = vst [vmem:[#allocation2 + $0x50] sm:$0xf] %v223
        %250 = vst [vmem:[#allocation2 + $0x58] sm:$0xf] %v224
        %251 = vst [vmem:[#allocation2 + $0x60] sm:$0xf] %v225
        %v252 = vld [vmem:[%s165] sm:$0xff]
        %v253 = vld [vmem:[%s165 + $0x8] sm:$0xff]
        %v254 = vld [vmem:[%s165 + $0x10] sm:$0xff]
        %v255 = vld [vmem:[%s165 + $0x18] sm:$0xff]
        %v256 = vld [vmem:[%s165 + $0x20] sm:$0xff]
        %v257 = vld [vmem:[%s165 + $0x28] sm:$0xff]
        %v258 = vld [vmem:[%s165 + $0x30] sm:$0xff]
        %s266 = scalar_lea.vmem [#allocation1], 1
        %267 = vst [vmem:[%s266] ss:$2 sm:$0xff] %v252
        %s268 = scalar_lea.vmem [#allocation1], 17
        %269 = vst [vmem:[%s268] ss:$2 sm:$0xff] %v253
        %s270 = scalar_lea.vmem [#allocation1], 33
        %271 = vst [vmem:[%s270] ss:$2 sm:$0xff] %v254
        %s272 = scalar_lea.vmem [#allocation1], 49
        %273 = vst [vmem:[%s272] ss:$2 sm:$0xff] %v255
        %v274 = vld.sshfl [vmem:[#allocation1] sm:$0xff pattern:$0x75316420]
        %v275 = vld.sshfl [vmem:[#allocation1 + $0x8] sm:$0xff pattern:$0x75316420]
        %v276 = vld.sshfl [vmem:[#allocation1 + $0x10] sm:$0xff pattern:$0x75316420]
        %v277 = vld.sshfl [vmem:[#allocation1 + $0x18] sm:$0xff pattern:$0x75316420]
        %v278 = vld.sshfl [vmem:[#allocation1 + $0x20] sm:$0xff pattern:$0x75316420]
        %v279 = vld.sshfl [vmem:[#allocation1 + $0x28] sm:$0xff pattern:$0x75316420]
        %v280 = vld.sshfl [vmem:[#allocation1 + $0x30] sm:$0xff pattern:$0x75316420]
        %v281 = vld.sshfl [vmem:[#allocation1 + $0x38] sm:$0xff pattern:$0x75316420]
        %282 = vst [vmem:[%s266] ss:$2 sm:$0xff] %v256
        %283 = vst [vmem:[%s268] ss:$2 sm:$0xff] %v257
        %284 = vst [vmem:[%s270] ss:$2 sm:$0xff] %v258
        %v285 = vld.sshfl [vmem:[#allocation1] sm:$0xff pattern:$0x75316420]
        %v286 = vld.sshfl [vmem:[#allocation1 + $0x8] sm:$0xff pattern:$0x75316420]
        %v287 = vld.sshfl [vmem:[#allocation1 + $0x10] sm:$0xff pattern:$0x75316420]
        %v288 = vld.sshfl [vmem:[#allocation1 + $0x18] sm:$0xff pattern:$0x75316420]
        %v289 = vld.sshfl [vmem:[#allocation1 + $0x20] sm:$0xff pattern:$0x75316420]
        %v290 = vld.sshfl [vmem:[#allocation1 + $0x28] sm:$0xff pattern:$0x75316420]
        %291 = vrot.lane.b32.xlu0 %v274, 126
        %v292 = vpop.permute.xlu0 %291
        %293 = vrot.lane.b32.xlu0 %v275, 126
        %v294 = vpop.permute.xlu0 %293
        %295 = vrot.lane.b32.xlu0 %v276, 126
        %v296 = vpop.permute.xlu0 %295
        %297 = vrot.lane.b32.xlu0 %v277, 126
        %v298 = vpop.permute.xlu0 %297
        %299 = vrot.lane.b32.xlu0 %v278, 126
        %v300 = vpop.permute.xlu0 %299
        %301 = vrot.lane.b32.xlu0 %v279, 126
        %v302 = vpop.permute.xlu0 %301
        %303 = vrot.lane.b32.xlu0 %v280, 126
        %v304 = vpop.permute.xlu0 %303
        %305 = vrot.lane.b32.xlu0 %v281, 126
        %v306 = vpop.permute.xlu0 %305
        %307 = vrot.lane.b32.xlu0 %v285, 126
        %v308 = vpop.permute.xlu0 %307
        %309 = vrot.lane.b32.xlu0 %v286, 126
        %v310 = vpop.permute.xlu0 %309
        %311 = vrot.lane.b32.xlu0 %v287, 126
        %v312 = vpop.permute.xlu0 %311
        %313 = vrot.lane.b32.xlu0 %v288, 126
        %v314 = vpop.permute.xlu0 %313
        %315 = vrot.lane.b32.xlu0 %v289, 126
        %v316 = vpop.permute.xlu0 %315
        %317 = vrot.lane.b32.xlu0 %v290, 126
        %v318 = vpop.permute.xlu0 %317
        %vm319 = vcmask 1031168
        %v320 = vsel %vm319, %v292, %v294
        %v321 = vsel %vm319, %v294, %v296
        %v322 = vsel %vm319, %v296, %v298
        %v323 = vsel %vm319, %v298, %v300
        %v324 = vsel %vm319, %v300, %v302
        %v325 = vsel %vm319, %v302, %v304
        %v326 = vsel %vm319, %v304, %v306
        %v327 = vsel %vm319, %v306, %v308
        %v328 = vsel %vm319, %v308, %v310
        %v329 = vsel %vm319, %v310, %v312
        %v330 = vsel %vm319, %v312, %v314
        %v331 = vsel %vm319, %v314, %v316
        %v332 = vsel %vm319, %v316, %v318
        %346 = vst [vmem:[#allocation2] sm:$0xf0] %v320
        %347 = vst [vmem:[#allocation2 + $0x8] sm:$0xf0] %v321
        %348 = vst [vmem:[#allocation2 + $0x10] sm:$0xf0] %v322
        %349 = vst [vmem:[#allocation2 + $0x18] sm:$0xf0] %v323
        %350 = vst [vmem:[#allocation2 + $0x20] sm:$0xf0] %v324
        %351 = vst [vmem:[#allocation2 + $0x28] sm:$0xf0] %v325
        %352 = vst [vmem:[#allocation2 + $0x30] sm:$0xf0] %v326
        %353 = vst [vmem:[#allocation2 + $0x38] sm:$0xf0] %v327
        %354 = vst [vmem:[#allocation2 + $0x40] sm:$0xf0] %v328
        %355 = vst [vmem:[#allocation2 + $0x48] sm:$0xf0] %v329
        %356 = vst [vmem:[#allocation2 + $0x50] sm:$0xf0] %v330
        %357 = vst [vmem:[#allocation2 + $0x58] sm:$0xf0] %v331
        %358 = vst [vmem:[#allocation2 + $0x60] sm:$0xf0] %v332
        %v359 = vld [vmem:[%s165] sm:$0xff]
        %v360 = vld [vmem:[%s165 + $0x8] sm:$0xff]
        %v361 = vld [vmem:[%s165 + $0x10] sm:$0xff]
        %v362 = vld [vmem:[%s165 + $0x18] sm:$0xff]
        %v363 = vld [vmem:[%s165 + $0x20] sm:$0xff]
        %v364 = vld [vmem:[%s165 + $0x28] sm:$0xff]
        %v365 = vld [vmem:[%s165 + $0x30] sm:$0xff]
        %373 = vst [vmem:[#allocation1] ss:$2 sm:$0xff] %v359
        %s374 = scalar_lea.vmem [#allocation1], 16
        %375 = vst [vmem:[%s374] ss:$2 sm:$0xff] %v360
        %s376 = scalar_lea.vmem [#allocation1], 32
        %377 = vst [vmem:[%s376] ss:$2 sm:$0xff] %v361
        %s378 = scalar_lea.vmem [#allocation1], 48
        %379 = vst [vmem:[%s378] ss:$2 sm:$0xff] %v362
        %v380 = vld.sshfl [vmem:[#allocation1] sm:$0xff pattern:$0x75316420]
        %v381 = vld.sshfl [vmem:[#allocation1 + $0x8] sm:$0xff pattern:$0x75316420]
        %v382 = vld.sshfl [vmem:[#allocation1 + $0x10] sm:$0xff pattern:$0x75316420]
        %v383 = vld.sshfl [vmem:[#allocation1 + $0x18] sm:$0xff pattern:$0x75316420]
        %v384 = vld.sshfl [vmem:[#allocation1 + $0x20] sm:$0xff pattern:$0x75316420]
        %v385 = vld.sshfl [vmem:[#allocation1 + $0x28] sm:$0xff pattern:$0x75316420]
        %v386 = vld.sshfl [vmem:[#allocation1 + $0x30] sm:$0xff pattern:$0x75316420]
        %v387 = vld.sshfl [vmem:[#allocation1 + $0x38] sm:$0xff pattern:$0x75316420]
        %388 = vst [vmem:[#allocation1] ss:$2 sm:$0xff] %v363
        %389 = vst [vmem:[%s374] ss:$2 sm:$0xff] %v364
        %390 = vst [vmem:[%s376] ss:$2 sm:$0xff] %v365
        %v391 = vld.sshfl [vmem:[#allocation1] sm:$0xff pattern:$0x75316420]
        %v392 = vld.sshfl [vmem:[#allocation1 + $0x8] sm:$0xff pattern:$0x75316420]
        %v393 = vld.sshfl [vmem:[#allocation1 + $0x10] sm:$0xff pattern:$0x75316420]
        %v394 = vld.sshfl [vmem:[#allocation1 + $0x18] sm:$0xff pattern:$0x75316420]
        %v395 = vld.sshfl [vmem:[#allocation1 + $0x20] sm:$0xff pattern:$0x75316420]
        %v396 = vld.sshfl [vmem:[#allocation1 + $0x28] sm:$0xff pattern:$0x75316420]
        %397 = vrot.lane.b32.xlu0 %v380, 124
        %v398 = vpop.permute.xlu0 %397
        %399 = vrot.lane.b32.xlu0 %v381, 124
        %v400 = vpop.permute.xlu0 %399
        %401 = vrot.lane.b32.xlu0 %v382, 124
        %v402 = vpop.permute.xlu0 %401
        %403 = vrot.lane.b32.xlu0 %v383, 124
        %v404 = vpop.permute.xlu0 %403
        %405 = vrot.lane.b32.xlu0 %v384, 124
        %v406 = vpop.permute.xlu0 %405
        %407 = vrot.lane.b32.xlu0 %v385, 124
        %v408 = vpop.permute.xlu0 %407
        %409 = vrot.lane.b32.xlu0 %v386, 124
        %v410 = vpop.permute.xlu0 %409
        %411 = vrot.lane.b32.xlu0 %v387, 124
        %v412 = vpop.permute.xlu0 %411
        %413 = vrot.lane.b32.xlu0 %v391, 124
        %v414 = vpop.permute.xlu0 %413
        %415 = vrot.lane.b32.xlu0 %v392, 124
        %v416 = vpop.permute.xlu0 %415
        %417 = vrot.lane.b32.xlu0 %v393, 124
        %v418 = vpop.permute.xlu0 %417
        %419 = vrot.lane.b32.xlu0 %v394, 124
        %v420 = vpop.permute.xlu0 %419
        %421 = vrot.lane.b32.xlu0 %v395, 124
        %v422 = vpop.permute.xlu0 %421
        %423 = vrot.lane.b32.xlu0 %v396, 124
        %v424 = vpop.permute.xlu0 %423
        %vm425 = vcmask 1014784
        %v426 = vsel %vm425, %v398, %v400
        %v427 = vsel %vm425, %v400, %v402
        %v428 = vsel %vm425, %v402, %v404
        %v429 = vsel %vm425, %v404, %v406
        %v430 = vsel %vm425, %v406, %v408
        %v431 = vsel %vm425, %v408, %v410
        %v432 = vsel %vm425, %v410, %v412
        %v433 = vsel %vm425, %v412, %v414
        %v434 = vsel %vm425, %v414, %v416
        %v435 = vsel %vm425, %v416, %v418
        %v436 = vsel %vm425, %v418, %v420
        %v437 = vsel %vm425, %v420, %v422
        %v438 = vsel %vm425, %v422, %v424
        %452 = vst [vmem:[#allocation2 + $0x68] sm:$0xf] %v426
        %453 = vst [vmem:[#allocation2 + $0x70] sm:$0xf] %v427
        %454 = vst [vmem:[#allocation2 + $0x78] sm:$0xf] %v428
        %455 = vst [vmem:[#allocation2 + $0x80] sm:$0xf] %v429
        %456 = vst [vmem:[#allocation2 + $0x88] sm:$0xf] %v430
        %457 = vst [vmem:[#allocation2 + $0x90] sm:$0xf] %v431
        %458 = vst [vmem:[#allocation2 + $0x98] sm:$0xf] %v432
        %459 = vst [vmem:[#allocation2 + $0xa0] sm:$0xf] %v433
        %460 = vst [vmem:[#allocation2 + $0xa8] sm:$0xf] %v434
        %461 = vst [vmem:[#allocation2 + $0xb0] sm:$0xf] %v435
        %462 = vst [vmem:[#allocation2 + $0xb8] sm:$0xf] %v436
        %463 = vst [vmem:[#allocation2 + $0xc0] sm:$0xf] %v437
        %464 = vst [vmem:[#allocation2 + $0xc8] sm:$0xf] %v438
        %v465 = vld [vmem:[%s165] sm:$0xff]
        %v466 = vld [vmem:[%s165 + $0x8] sm:$0xff]
        %v467 = vld [vmem:[%s165 + $0x10] sm:$0xff]
        %v468 = vld [vmem:[%s165 + $0x18] sm:$0xff]
        %v469 = vld [vmem:[%s165 + $0x20] sm:$0xff]
        %v470 = vld [vmem:[%s165 + $0x28] sm:$0xff]
        %v471 = vld [vmem:[%s165 + $0x30] sm:$0xff]
        %s479 = scalar_lea.vmem [#allocation1], 1
        %480 = vst [vmem:[%s479] ss:$2 sm:$0xff] %v465
        %s481 = scalar_lea.vmem [#allocation1], 17
        %482 = vst [vmem:[%s481] ss:$2 sm:$0xff] %v466
        %s483 = scalar_lea.vmem [#allocation1], 33
        %484 = vst [vmem:[%s483] ss:$2 sm:$0xff] %v467
        %s485 = scalar_lea.vmem [#allocation1], 49
        %486 = vst [vmem:[%s485] ss:$2 sm:$0xff] %v468
        %v487 = vld.sshfl [vmem:[#allocation1] sm:$0xff pattern:$0x75316420]
        %v488 = vld.sshfl [vmem:[#allocation1 + $0x8] sm:$0xff pattern:$0x75316420]
        %v489 = vld.sshfl [vmem:[#allocation1 + $0x10] sm:$0xff pattern:$0x75316420]
        %v490 = vld.sshfl [vmem:[#allocation1 + $0x18] sm:$0xff pattern:$0x75316420]
        %v491 = vld.sshfl [vmem:[#allocation1 + $0x20] sm:$0xff pattern:$0x75316420]
        %v492 = vld.sshfl [vmem:[#allocation1 + $0x28] sm:$0xff pattern:$0x75316420]
        %v493 = vld.sshfl [vmem:[#allocation1 + $0x30] sm:$0xff pattern:$0x75316420]
        %v494 = vld.sshfl [vmem:[#allocation1 + $0x38] sm:$0xff pattern:$0x75316420]
        %495 = vst [vmem:[%s479] ss:$2 sm:$0xff] %v469
        %496 = vst [vmem:[%s481] ss:$2 sm:$0xff] %v470
        %497 = vst [vmem:[%s483] ss:$2 sm:$0xff] %v471
        %v498 = vld.sshfl [vmem:[#allocation1] sm:$0xff pattern:$0x75316420]
        %v499 = vld.sshfl [vmem:[#allocation1 + $0x8] sm:$0xff pattern:$0x75316420]
        %v500 = vld.sshfl [vmem:[#allocation1 + $0x10] sm:$0xff pattern:$0x75316420]
        %v501 = vld.sshfl [vmem:[#allocation1 + $0x18] sm:$0xff pattern:$0x75316420]
        %v502 = vld.sshfl [vmem:[#allocation1 + $0x20] sm:$0xff pattern:$0x75316420]
        %v503 = vld.sshfl [vmem:[#allocation1 + $0x28] sm:$0xff pattern:$0x75316420]
        %504 = vrot.lane.b32.xlu0 %v487, 88
        %v505 = vpop.permute.xlu0 %504
        %506 = vrot.lane.b32.xlu0 %v488, 88
        %v507 = vpop.permute.xlu0 %506
        %508 = vrot.lane.b32.xlu0 %v489, 88
        %v509 = vpop.permute.xlu0 %508
        %510 = vrot.lane.b32.xlu0 %v490, 88
        %v511 = vpop.permute.xlu0 %510
        %512 = vrot.lane.b32.xlu0 %v491, 88
        %v513 = vpop.permute.xlu0 %512
        %514 = vrot.lane.b32.xlu0 %v492, 88
        %v515 = vpop.permute.xlu0 %514
        %516 = vrot.lane.b32.xlu0 %v493, 88
        %v517 = vpop.permute.xlu0 %516
        %518 = vrot.lane.b32.xlu0 %v494, 88
        %v519 = vpop.permute.xlu0 %518
        %520 = vrot.lane.b32.xlu0 %v498, 88
        %v521 = vpop.permute.xlu0 %520
        %522 = vrot.lane.b32.xlu0 %v499, 88
        %v523 = vpop.permute.xlu0 %522
        %524 = vrot.lane.b32.xlu0 %v500, 88
        %v525 = vpop.permute.xlu0 %524
        %526 = vrot.lane.b32.xlu0 %v501, 88
        %v527 = vpop.permute.xlu0 %526
        %528 = vrot.lane.b32.xlu0 %v502, 88
        %v529 = vpop.permute.xlu0 %528
        %530 = vrot.lane.b32.xlu0 %v503, 88
        %v531 = vpop.permute.xlu0 %530
        %vm532 = vcmask 719872
        %v533 = vsel %vm532, %v505, %v507
        %v534 = vsel %vm532, %v507, %v509
        %v535 = vsel %vm532, %v509, %v511
        %v536 = vsel %vm532, %v511, %v513
        %v537 = vsel %vm532, %v513, %v515
        %v538 = vsel %vm532, %v515, %v517
        %v539 = vsel %vm532, %v517, %v519
        %v540 = vsel %vm532, %v519, %v521
        %v541 = vsel %vm532, %v521, %v523
        %v542 = vsel %vm532, %v523, %v525
        %v543 = vsel %vm532, %v525, %v527
        %v544 = vsel %vm532, %v527, %v529
        %v545 = vsel %vm532, %v529, %v531
        %559 = vst [vmem:[#allocation2 + $0x68] sm:$0xf0] %v533
        %560 = vst [vmem:[#allocation2 + $0x70] sm:$0xf0] %v534
        %561 = vst [vmem:[#allocation2 + $0x78] sm:$0xf0] %v535
        %562 = vst [vmem:[#allocation2 + $0x80] sm:$0xf0] %v536
        %563 = vst [vmem:[#allocation2 + $0x88] sm:$0xf0] %v537
        %564 = vst [vmem:[#allocation2 + $0x90] sm:$0xf0] %v538
        %565 = vst [vmem:[#allocation2 + $0x98] sm:$0xf0] %v539
        %566 = vst [vmem:[#allocation2 + $0xa0] sm:$0xf0] %v540
        %567 = vst [vmem:[#allocation2 + $0xa8] sm:$0xf0] %v541
        %568 = vst [vmem:[#allocation2 + $0xb0] sm:$0xf0] %v542
        %569 = vst [vmem:[#allocation2 + $0xb8] sm:$0xf0] %v543
        %570 = vst [vmem:[#allocation2 + $0xc0] sm:$0xf0] %v544
        %571 = vst [vmem:[#allocation2 + $0xc8] sm:$0xf0] %v545
        %v572 = vld [vmem:[%s165] sm:$0xff]
        %v573 = vld [vmem:[%s165 + $0x8] sm:$0xff]
        %v574 = vld [vmem:[%s165 + $0x10] sm:$0xff]
        %v575 = vld [vmem:[%s165 + $0x18] sm:$0xff]
        %v576 = vld [vmem:[%s165 + $0x20] sm:$0xff]
        %v577 = vld [vmem:[%s165 + $0x28] sm:$0xff]
        %v578 = vld [vmem:[%s165 + $0x30] sm:$0xff]
        %586 = vst [vmem:[#allocation1] ss:$2 sm:$0xff] %v572
        %s587 = scalar_lea.vmem [#allocation1], 16
        %588 = vst [vmem:[%s587] ss:$2 sm:$0xff] %v573
        %s589 = scalar_lea.vmem [#allocation1], 32
        %590 = vst [vmem:[%s589] ss:$2 sm:$0xff] %v574
        %s591 = scalar_lea.vmem [#allocation1], 48
        %592 = vst [vmem:[%s591] ss:$2 sm:$0xff] %v575
        %v593 = vld.sshfl [vmem:[#allocation1] sm:$0xff pattern:$0x75316420]
        %v594 = vld.sshfl [vmem:[#allocation1 + $0x8] sm:$0xff pattern:$0x75316420]
        %v595 = vld.sshfl [vmem:[#allocation1 + $0x10] sm:$0xff pattern:$0x75316420]
        %v596 = vld.sshfl [vmem:[#allocation1 + $0x18] sm:$0xff pattern:$0x75316420]
        %v597 = vld.sshfl [vmem:[#allocation1 + $0x20] sm:$0xff pattern:$0x75316420]
        %v598 = vld.sshfl [vmem:[#allocation1 + $0x28] sm:$0xff pattern:$0x75316420]
        %v599 = vld.sshfl [vmem:[#allocation1 + $0x30] sm:$0xff pattern:$0x75316420]
        %v600 = vld.sshfl [vmem:[#allocation1 + $0x38] sm:$0xff pattern:$0x75316420]
        %601 = vst [vmem:[#allocation1] ss:$2 sm:$0xff] %v576
        %602 = vst [vmem:[%s587] ss:$2 sm:$0xff] %v577
        %603 = vst [vmem:[%s589] ss:$2 sm:$0xff] %v578
        %v604 = vld.sshfl [vmem:[#allocation1] sm:$0xff pattern:$0x75316420]
        %v605 = vld.sshfl [vmem:[#allocation1 + $0x8] sm:$0xff pattern:$0x75316420]
        %v606 = vld.sshfl [vmem:[#allocation1 + $0x10] sm:$0xff pattern:$0x75316420]
        %v607 = vld.sshfl [vmem:[#allocation1 + $0x18] sm:$0xff pattern:$0x75316420]
        %v608 = vld.sshfl [vmem:[#allocation1 + $0x20] sm:$0xff pattern:$0x75316420]
        %v609 = vld.sshfl [vmem:[#allocation1 + $0x28] sm:$0xff pattern:$0x75316420]
        %610 = vrot.lane.b32.xlu0 %v593, 86
        %v611 = vpop.permute.xlu0 %610
        %612 = vrot.lane.b32.xlu0 %v594, 86
        %v613 = vpop.permute.xlu0 %612
        %614 = vrot.lane.b32.xlu0 %v595, 86
        %v615 = vpop.permute.xlu0 %614
        %616 = vrot.lane.b32.xlu0 %v596, 86
        %v617 = vpop.permute.xlu0 %616
        %618 = vrot.lane.b32.xlu0 %v597, 86
        %v619 = vpop.permute.xlu0 %618
        %620 = vrot.lane.b32.xlu0 %v598, 86
        %v621 = vpop.permute.xlu0 %620
        %622 = vrot.lane.b32.xlu0 %v599, 86
        %v623 = vpop.permute.xlu0 %622
        %624 = vrot.lane.b32.xlu0 %v600, 86
        %v625 = vpop.permute.xlu0 %624
        %626 = vrot.lane.b32.xlu0 %v604, 86
        %v627 = vpop.permute.xlu0 %626
        %628 = vrot.lane.b32.xlu0 %v605, 86
        %v629 = vpop.permute.xlu0 %628
        %630 = vrot.lane.b32.xlu0 %v606, 86
        %v631 = vpop.permute.xlu0 %630
        %632 = vrot.lane.b32.xlu0 %v607, 86
        %v633 = vpop.permute.xlu0 %632
        %634 = vrot.lane.b32.xlu0 %v608, 86
        %v635 = vpop.permute.xlu0 %634
        %636 = vrot.lane.b32.xlu0 %v609, 86
        %v637 = vpop.permute.xlu0 %636
        %vm638 = vcmask 703488
        %v639 = vsel %vm638, %v611, %v613
        %v640 = vsel %vm638, %v613, %v615
        %v641 = vsel %vm638, %v615, %v617
        %v642 = vsel %vm638, %v617, %v619
        %v643 = vsel %vm638, %v619, %v621
        %v644 = vsel %vm638, %v621, %v623
        %v645 = vsel %vm638, %v623, %v625
        %v646 = vsel %vm638, %v625, %v627
        %v647 = vsel %vm638, %v627, %v629
        %v648 = vsel %vm638, %v629, %v631
        %v649 = vsel %vm638, %v631, %v633
        %v650 = vsel %vm638, %v633, %v635
        %v651 = vsel %vm638, %v635, %v637
        %665 = vst [vmem:[#allocation2 + $0xd0] sm:$0xf] %v639
        %666 = vst [vmem:[#allocation2 + $0xd8] sm:$0xf] %v640
        %667 = vst [vmem:[#allocation2 + $0xe0] sm:$0xf] %v641
        %668 = vst [vmem:[#allocation2 + $0xe8] sm:$0xf] %v642
        %669 = vst [vmem:[#allocation2 + $0xf0] sm:$0xf] %v643
        %670 = vst [vmem:[#allocation2 + $0xf8] sm:$0xf] %v644
        %671 = vst [vmem:[#allocation2 + $0x100] sm:$0xf] %v645
        %672 = vst [vmem:[#allocation2 + $0x108] sm:$0xf] %v646
        %673 = vst [vmem:[#allocation2 + $0x110] sm:$0xf] %v647
        %674 = vst [vmem:[#allocation2 + $0x118] sm:$0xf] %v648
        %675 = vst [vmem:[#allocation2 + $0x120] sm:$0xf] %v649
        %676 = vst [vmem:[#allocation2 + $0x128] sm:$0xf] %v650
        %677 = vst [vmem:[#allocation2 + $0x130] sm:$0xf] %v651
        %v678 = vld [vmem:[%s165] sm:$0xff]
        %v679 = vld [vmem:[%s165 + $0x8] sm:$0xff]
        %v680 = vld [vmem:[%s165 + $0x10] sm:$0xff]
        %v681 = vld [vmem:[%s165 + $0x18] sm:$0xff]
        %v682 = vld [vmem:[%s165 + $0x20] sm:$0xff]
        %v683 = vld [vmem:[%s165 + $0x28] sm:$0xff]
        %v684 = vld [vmem:[%s165 + $0x30] sm:$0xff]
        %s692 = scalar_lea.vmem [#allocation1], 1
        %693 = vst [vmem:[%s692] ss:$2 sm:$0xff] %v678
        %s694 = scalar_lea.vmem [#allocation1], 17
        %695 = vst [vmem:[%s694] ss:$2 sm:$0xff] %v679
        %s696 = scalar_lea.vmem [#allocation1], 33
        %697 = vst [vmem:[%s696] ss:$2 sm:$0xff] %v680
        %s698 = scalar_lea.vmem [#allocation1], 49
        %699 = vst [vmem:[%s698] ss:$2 sm:$0xff] %v681
        %v700 = vld.sshfl [vmem:[#allocation1] sm:$0xff pattern:$0x75316420]
        %v701 = vld.sshfl [vmem:[#allocation1 + $0x8] sm:$0xff pattern:$0x75316420]
        %v702 = vld.sshfl [vmem:[#allocation1 + $0x10] sm:$0xff pattern:$0x75316420]
        %v703 = vld.sshfl [vmem:[#allocation1 + $0x18] sm:$0xff pattern:$0x75316420]
        %v704 = vld.sshfl [vmem:[#allocation1 + $0x20] sm:$0xff pattern:$0x75316420]
        %v705 = vld.sshfl [vmem:[#allocation1 + $0x28] sm:$0xff pattern:$0x75316420]
        %v706 = vld.sshfl [vmem:[#allocation1 + $0x30] sm:$0xff pattern:$0x75316420]
        %v707 = vld.sshfl [vmem:[#allocation1 + $0x38] sm:$0xff pattern:$0x75316420]
        %708 = vst [vmem:[%s692] ss:$2 sm:$0xff] %v682
        %709 = vst [vmem:[%s694] ss:$2 sm:$0xff] %v683
        %710 = vst [vmem:[%s696] ss:$2 sm:$0xff] %v684
        %v711 = vld.sshfl [vmem:[#allocation1] sm:$0xff pattern:$0x75316420]
        %v712 = vld.sshfl [vmem:[#allocation1 + $0x8] sm:$0xff pattern:$0x75316420]
        %v713 = vld.sshfl [vmem:[#allocation1 + $0x10] sm:$0xff pattern:$0x75316420]
        %v714 = vld.sshfl [vmem:[#allocation1 + $0x18] sm:$0xff pattern:$0x75316420]
        %v715 = vld.sshfl [vmem:[#allocation1 + $0x20] sm:$0xff pattern:$0x75316420]
        %v716 = vld.sshfl [vmem:[#allocation1 + $0x28] sm:$0xff pattern:$0x75316420]
        %717 = vrot.lane.b32.xlu0 %v700, 84
        %v718 = vpop.permute.xlu0 %717
        %719 = vrot.lane.b32.xlu0 %v701, 84
        %v720 = vpop.permute.xlu0 %719
        %721 = vrot.lane.b32.xlu0 %v702, 84
        %v722 = vpop.permute.xlu0 %721
        %723 = vrot.lane.b32.xlu0 %v703, 84
        %v724 = vpop.permute.xlu0 %723
        %725 = vrot.lane.b32.xlu0 %v704, 84
        %v726 = vpop.permute.xlu0 %725
        %727 = vrot.lane.b32.xlu0 %v705, 84
        %v728 = vpop.permute.xlu0 %727
        %729 = vrot.lane.b32.xlu0 %v706, 84
        %v730 = vpop.permute.xlu0 %729
        %731 = vrot.lane.b32.xlu0 %v707, 84
        %v732 = vpop.permute.xlu0 %731
        %733 = vrot.lane.b32.xlu0 %v711, 84
        %v734 = vpop.permute.xlu0 %733
        %735 = vrot.lane.b32.xlu0 %v712, 84
        %v736 = vpop.permute.xlu0 %735
        %737 = vrot.lane.b32.xlu0 %v713, 84
        %v738 = vpop.permute.xlu0 %737
        %739 = vrot.lane.b32.xlu0 %v714, 84
        %v740 = vpop.permute.xlu0 %739
        %741 = vrot.lane.b32.xlu0 %v715, 84
        %v742 = vpop.permute.xlu0 %741
        %743 = vrot.lane.b32.xlu0 %v716, 84
        %v744 = vpop.permute.xlu0 %743
        %vm745 = vcmask 687104
        %v746 = vsel %vm745, %v718, %v720
        %v747 = vsel %vm745, %v720, %v722
        %v748 = vsel %vm745, %v722, %v724
        %v749 = vsel %vm745, %v724, %v726
        %v750 = vsel %vm745, %v726, %v728
        %v751 = vsel %vm745, %v728, %v730
        %v752 = vsel %vm745, %v730, %v732
        %v753 = vsel %vm745, %v732, %v734
        %v754 = vsel %vm745, %v734, %v736
        %v755 = vsel %vm745, %v736, %v738
        %v756 = vsel %vm745, %v738, %v740
        %v757 = vsel %vm745, %v740, %v742
        %v758 = vsel %vm745, %v742, %v744
        %772 = vst [vmem:[#allocation2 + $0xd0] sm:$0xf0] %v746
        %773 = vst [vmem:[#allocation2 + $0xd8] sm:$0xf0] %v747
        %774 = vst [vmem:[#allocation2 + $0xe0] sm:$0xf0] %v748
        %775 = vst [vmem:[#allocation2 + $0xe8] sm:$0xf0] %v749
        %776 = vst [vmem:[#allocation2 + $0xf0] sm:$0xf0] %v750
        %777 = vst [vmem:[#allocation2 + $0xf8] sm:$0xf0] %v751
        %778 = vst [vmem:[#allocation2 + $0x100] sm:$0xf0] %v752
        %779 = vst [vmem:[#allocation2 + $0x108] sm:$0xf0] %v753
        %780 = vst [vmem:[#allocation2 + $0x110] sm:$0xf0] %v754
        %781 = vst [vmem:[#allocation2 + $0x118] sm:$0xf0] %v755
        %782 = vst [vmem:[#allocation2 + $0x120] sm:$0xf0] %v756
        %783 = vst [vmem:[#allocation2 + $0x128] sm:$0xf0] %v757
        %784 = vst [vmem:[#allocation2 + $0x130] sm:$0xf0] %v758
        %v785 = vld [vmem:[%s165] sm:$0xff]
        %v786 = vld [vmem:[%s165 + $0x8] sm:$0xff]
        %v787 = vld [vmem:[%s165 + $0x10] sm:$0xff]
        %v788 = vld [vmem:[%s165 + $0x18] sm:$0xff]
        %v789 = vld [vmem:[%s165 + $0x20] sm:$0xff]
        %v790 = vld [vmem:[%s165 + $0x28] sm:$0xff]
        %v791 = vld [vmem:[%s165 + $0x30] sm:$0xff]
        %799 = vst [vmem:[#allocation1] ss:$2 sm:$0xff] %v785
        %s800 = scalar_lea.vmem [#allocation1], 16
        %801 = vst [vmem:[%s800] ss:$2 sm:$0xff] %v786
        %s802 = scalar_lea.vmem [#allocation1], 32
        %803 = vst [vmem:[%s802] ss:$2 sm:$0xff] %v787
        %s804 = scalar_lea.vmem [#allocation1], 48
        %805 = vst [vmem:[%s804] ss:$2 sm:$0xff] %v788
        %v806 = vld.sshfl [vmem:[#allocation1] sm:$0xff pattern:$0x75316420]
        %v807 = vld.sshfl [vmem:[#allocation1 + $0x8] sm:$0xff pattern:$0x75316420]
        %v808 = vld.sshfl [vmem:[#allocation1 + $0x10] sm:$0xff pattern:$0x75316420]
        %v809 = vld.sshfl [vmem:[#allocation1 + $0x18] sm:$0xff pattern:$0x75316420]
        %v810 = vld.sshfl [vmem:[#allocation1 + $0x20] sm:$0xff pattern:$0x75316420]
        %v811 = vld.sshfl [vmem:[#allocation1 + $0x28] sm:$0xff pattern:$0x75316420]
        %v812 = vld.sshfl [vmem:[#allocation1 + $0x30] sm:$0xff pattern:$0x75316420]
        %v813 = vld.sshfl [vmem:[#allocation1 + $0x38] sm:$0xff pattern:$0x75316420]
        %814 = vst [vmem:[#allocation1] ss:$2 sm:$0xff] %v789
        %815 = vst [vmem:[%s800] ss:$2 sm:$0xff] %v790
        %816 = vst [vmem:[%s802] ss:$2 sm:$0xff] %v791
        %v817 = vld.sshfl [vmem:[#allocation1] sm:$0xff pattern:$0x75316420]
        %v818 = vld.sshfl [vmem:[#allocation1 + $0x8] sm:$0xff pattern:$0x75316420]
        %v819 = vld.sshfl [vmem:[#allocation1 + $0x10] sm:$0xff pattern:$0x75316420]
        %v820 = vld.sshfl [vmem:[#allocation1 + $0x18] sm:$0xff pattern:$0x75316420]
        %v821 = vld.sshfl [vmem:[#allocation1 + $0x20] sm:$0xff pattern:$0x75316420]
        %v822 = vld.sshfl [vmem:[#allocation1 + $0x28] sm:$0xff pattern:$0x75316420]
        %823 = vrot.lane.b32.xlu0 %v806, 48
        %v824 = vpop.permute.xlu0 %823
        %825 = vrot.lane.b32.xlu0 %v807, 48
        %v826 = vpop.permute.xlu0 %825
        %827 = vrot.lane.b32.xlu0 %v808, 48
        %v828 = vpop.permute.xlu0 %827
        %829 = vrot.lane.b32.xlu0 %v809, 48
        %v830 = vpop.permute.xlu0 %829
        %831 = vrot.lane.b32.xlu0 %v810, 48
        %v832 = vpop.permute.xlu0 %831
        %833 = vrot.lane.b32.xlu0 %v811, 48
        %v834 = vpop.permute.xlu0 %833
        %835 = vrot.lane.b32.xlu0 %v812, 48
        %v836 = vpop.permute.xlu0 %835
        %837 = vrot.lane.b32.xlu0 %v813, 48
        %v838 = vpop.permute.xlu0 %837
        %839 = vrot.lane.b32.xlu0 %v817, 48
        %v840 = vpop.permute.xlu0 %839
        %841 = vrot.lane.b32.xlu0 %v818, 48
        %v842 = vpop.permute.xlu0 %841
        %843 = vrot.lane.b32.xlu0 %v819, 48
        %v844 = vpop.permute.xlu0 %843
        %845 = vrot.lane.b32.xlu0 %v820, 48
        %v846 = vpop.permute.xlu0 %845
        %847 = vrot.lane.b32.xlu0 %v821, 48
        %v848 = vpop.permute.xlu0 %847
        %849 = vrot.lane.b32.xlu0 %v822, 48
        %v850 = vpop.permute.xlu0 %849
        %vm851 = vcmask 392192
        %v852 = vsel %vm851, %v824, %v826
        %v853 = vsel %vm851, %v826, %v828
        %v854 = vsel %vm851, %v828, %v830
        %v855 = vsel %vm851, %v830, %v832
        %v856 = vsel %vm851, %v832, %v834
        %v857 = vsel %vm851, %v834, %v836
        %v858 = vsel %vm851, %v836, %v838
        %v859 = vsel %vm851, %v838, %v840
        %v860 = vsel %vm851, %v840, %v842
        %v861 = vsel %vm851, %v842, %v844
        %v862 = vsel %vm851, %v844, %v846
        %v863 = vsel %vm851, %v846, %v848
        %v864 = vsel %vm851, %v848, %v850
        %878 = vst [vmem:[#allocation2 + $0x138] sm:$0xf] %v852
        %879 = vst [vmem:[#allocation2 + $0x140] sm:$0xf] %v853
        %880 = vst [vmem:[#allocation2 + $0x148] sm:$0xf] %v854
        %881 = vst [vmem:[#allocation2 + $0x150] sm:$0xf] %v855
        %882 = vst [vmem:[#allocation2 + $0x158] sm:$0xf] %v856
        %883 = vst [vmem:[#allocation2 + $0x160] sm:$0xf] %v857
        %884 = vst [vmem:[#allocation2 + $0x168] sm:$0xf] %v858
        %885 = vst [vmem:[#allocation2 + $0x170] sm:$0xf] %v859
        %886 = vst [vmem:[#allocation2 + $0x178] sm:$0xf] %v860
        %887 = vst [vmem:[#allocation2 + $0x180] sm:$0xf] %v861
        %888 = vst [vmem:[#allocation2 + $0x188] sm:$0xf] %v862
        %889 = vst [vmem:[#allocation2 + $0x190] sm:$0xf] %v863
        %890 = vst [vmem:[#allocation2 + $0x198] sm:$0xf] %v864
        %v891 = vld [vmem:[%s165] sm:$0xff]
        %v892 = vld [vmem:[%s165 + $0x8] sm:$0xff]
        %v893 = vld [vmem:[%s165 + $0x10] sm:$0xff]
        %v894 = vld [vmem:[%s165 + $0x18] sm:$0xff]
        %v895 = vld [vmem:[%s165 + $0x20] sm:$0xff]
        %v896 = vld [vmem:[%s165 + $0x28] sm:$0xff]
        %v897 = vld [vmem:[%s165 + $0x30] sm:$0xff]
        %s905 = scalar_lea.vmem [#allocation1], 1
        %906 = vst [vmem:[%s905] ss:$2 sm:$0xff] %v891
        %s907 = scalar_lea.vmem [#allocation1], 17
        %908 = vst [vmem:[%s907] ss:$2 sm:$0xff] %v892
        %s909 = scalar_lea.vmem [#allocation1], 33
        %910 = vst [vmem:[%s909] ss:$2 sm:$0xff] %v893
        %s911 = scalar_lea.vmem [#allocation1], 49
        %912 = vst [vmem:[%s911] ss:$2 sm:$0xff] %v894
        %v913 = vld.sshfl [vmem:[#allocation1] sm:$0xff pattern:$0x75316420]
        %v914 = vld.sshfl [vmem:[#allocation1 + $0x8] sm:$0xff pattern:$0x75316420]
        %v915 = vld.sshfl [vmem:[#allocation1 + $0x10] sm:$0xff pattern:$0x75316420]
        %v916 = vld.sshfl [vmem:[#allocation1 + $0x18] sm:$0xff pattern:$0x75316420]
        %v917 = vld.sshfl [vmem:[#allocation1 + $0x20] sm:$0xff pattern:$0x75316420]
        %v918 = vld.sshfl [vmem:[#allocation1 + $0x28] sm:$0xff pattern:$0x75316420]
        %v919 = vld.sshfl [vmem:[#allocation1 + $0x30] sm:$0xff pattern:$0x75316420]
        %v920 = vld.sshfl [vmem:[#allocation1 + $0x38] sm:$0xff pattern:$0x75316420]
        %921 = vst [vmem:[%s905] ss:$2 sm:$0xff] %v895
        %922 = vst [vmem:[%s907] ss:$2 sm:$0xff] %v896
        %923 = vst [vmem:[%s909] ss:$2 sm:$0xff] %v897
        %v924 = vld.sshfl [vmem:[#allocation1] sm:$0xff pattern:$0x75316420]
        %v925 = vld.sshfl [vmem:[#allocation1 + $0x8] sm:$0xff pattern:$0x75316420]
        %v926 = vld.sshfl [vmem:[#allocation1 + $0x10] sm:$0xff pattern:$0x75316420]
        %v927 = vld.sshfl [vmem:[#allocation1 + $0x18] sm:$0xff pattern:$0x75316420]
        %v928 = vld.sshfl [vmem:[#allocation1 + $0x20] sm:$0xff pattern:$0x75316420]
        %v929 = vld.sshfl [vmem:[#allocation1 + $0x28] sm:$0xff pattern:$0x75316420]
        %930 = vrot.lane.b32.xlu0 %v913, 46
        %v931 = vpop.permute.xlu0 %930
        %932 = vrot.lane.b32.xlu0 %v914, 46
        %v933 = vpop.permute.xlu0 %932
        %934 = vrot.lane.b32.xlu0 %v915, 46
        %v935 = vpop.permute.xlu0 %934
        %936 = vrot.lane.b32.xlu0 %v916, 46
        %v937 = vpop.permute.xlu0 %936
        %938 = vrot.lane.b32.xlu0 %v917, 46
        %v939 = vpop.permute.xlu0 %938
        %940 = vrot.lane.b32.xlu0 %v918, 46
        %v941 = vpop.permute.xlu0 %940
        %942 = vrot.lane.b32.xlu0 %v919, 46
        %v943 = vpop.permute.xlu0 %942
        %944 = vrot.lane.b32.xlu0 %v920, 46
        %v945 = vpop.permute.xlu0 %944
        %946 = vrot.lane.b32.xlu0 %v924, 46
        %v947 = vpop.permute.xlu0 %946
        %948 = vrot.lane.b32.xlu0 %v925, 46
        %v949 = vpop.permute.xlu0 %948
        %950 = vrot.lane.b32.xlu0 %v926, 46
        %v951 = vpop.permute.xlu0 %950
        %952 = vrot.lane.b32.xlu0 %v927, 46
        %v953 = vpop.permute.xlu0 %952
        %954 = vrot.lane.b32.xlu0 %v928, 46
        %v955 = vpop.permute.xlu0 %954
        %956 = vrot.lane.b32.xlu0 %v929, 46
        %v957 = vpop.permute.xlu0 %956
        %vm958 = vcmask 375808
        %v959 = vsel %vm958, %v931, %v933
        %v960 = vsel %vm958, %v933, %v935
        %v961 = vsel %vm958, %v935, %v937
        %v962 = vsel %vm958, %v937, %v939
        %v963 = vsel %vm958, %v939, %v941
        %v964 = vsel %vm958, %v941, %v943
        %v965 = vsel %vm958, %v943, %v945
        %v966 = vsel %vm958, %v945, %v947
        %v967 = vsel %vm958, %v947, %v949
        %v968 = vsel %vm958, %v949, %v951
        %v969 = vsel %vm958, %v951, %v953
        %v970 = vsel %vm958, %v953, %v955
        %v971 = vsel %vm958, %v955, %v957
        %985 = vst [vmem:[#allocation2 + $0x138] sm:$0xf0] %v959
        %986 = vst [vmem:[#allocation2 + $0x140] sm:$0xf0] %v960
        %987 = vst [vmem:[#allocation2 + $0x148] sm:$0xf0] %v961
        %988 = vst [vmem:[#allocation2 + $0x150] sm:$0xf0] %v962
        %989 = vst [vmem:[#allocation2 + $0x158] sm:$0xf0] %v963
        %990 = vst [vmem:[#allocation2 + $0x160] sm:$0xf0] %v964
        %991 = vst [vmem:[#allocation2 + $0x168] sm:$0xf0] %v965
        %992 = vst [vmem:[#allocation2 + $0x170] sm:$0xf0] %v966
        %993 = vst [vmem:[#allocation2 + $0x178] sm:$0xf0] %v967
        %994 = vst [vmem:[#allocation2 + $0x180] sm:$0xf0] %v968
        %995 = vst [vmem:[#allocation2 + $0x188] sm:$0xf0] %v969
        %996 = vst [vmem:[#allocation2 + $0x190] sm:$0xf0] %v970
        %997 = vst [vmem:[#allocation2 + $0x198] sm:$0xf0] %v971
        %v998 = vld [vmem:[%s165] sm:$0xff]
        %v999 = vld [vmem:[%s165 + $0x8] sm:$0xff]
        %v1000 = vld [vmem:[%s165 + $0x10] sm:$0xff]
        %v1001 = vld [vmem:[%s165 + $0x18] sm:$0xff]
        %v1002 = vld [vmem:[%s165 + $0x20] sm:$0xff]
        %v1003 = vld [vmem:[%s165 + $0x28] sm:$0xff]
        %v1004 = vld [vmem:[%s165 + $0x30] sm:$0xff]
        %1012 = vst [vmem:[#allocation1] ss:$2 sm:$0xff] %v998
        %s1013 = scalar_lea.vmem [#allocation1], 16
        %1014 = vst [vmem:[%s1013] ss:$2 sm:$0xff] %v999
        %s1015 = scalar_lea.vmem [#allocation1], 32
        %1016 = vst [vmem:[%s1015] ss:$2 sm:$0xff] %v1000
        %s1017 = scalar_lea.vmem [#allocation1], 48
        %1018 = vst [vmem:[%s1017] ss:$2 sm:$0xff] %v1001
        %v1019 = vld.sshfl [vmem:[#allocation1] sm:$0xff pattern:$0x75316420]
        %v1020 = vld.sshfl [vmem:[#allocation1 + $0x8] sm:$0xff pattern:$0x75316420]
        %v1021 = vld.sshfl [vmem:[#allocation1 + $0x10] sm:$0xff pattern:$0x75316420]
        %v1022 = vld.sshfl [vmem:[#allocation1 + $0x18] sm:$0xff pattern:$0x75316420]
        %v1023 = vld.sshfl [vmem:[#allocation1 + $0x20] sm:$0xff pattern:$0x75316420]
        %v1024 = vld.sshfl [vmem:[#allocation1 + $0x28] sm:$0xff pattern:$0x75316420]
        %v1025 = vld.sshfl [vmem:[#allocation1 + $0x30] sm:$0xff pattern:$0x75316420]
        %v1026 = vld.sshfl [vmem:[#allocation1 + $0x38] sm:$0xff pattern:$0x75316420]
        %1027 = vst [vmem:[#allocation1] ss:$2 sm:$0xff] %v1002
        %1028 = vst [vmem:[%s1013] ss:$2 sm:$0xff] %v1003
        %1029 = vst [vmem:[%s1015] ss:$2 sm:$0xff] %v1004
        %v1030 = vld.sshfl [vmem:[#allocation1] sm:$0xff pattern:$0x75316420]
        %v1031 = vld.sshfl [vmem:[#allocation1 + $0x8] sm:$0xff pattern:$0x75316420]
        %v1032 = vld.sshfl [vmem:[#allocation1 + $0x10] sm:$0xff pattern:$0x75316420]
        %v1033 = vld.sshfl [vmem:[#allocation1 + $0x18] sm:$0xff pattern:$0x75316420]
        %v1034 = vld.sshfl [vmem:[#allocation1 + $0x20] sm:$0xff pattern:$0x75316420]
        %v1035 = vld.sshfl [vmem:[#allocation1 + $0x28] sm:$0xff pattern:$0x75316420]
        %1036 = vrot.lane.b32.xlu0 %v1019, 44
        %v1037 = vpop.permute.xlu0 %1036
        %1038 = vrot.lane.b32.xlu0 %v1020, 44
        %v1039 = vpop.permute.xlu0 %1038
        %1040 = vrot.lane.b32.xlu0 %v1021, 44
        %v1041 = vpop.permute.xlu0 %1040
        %1042 = vrot.lane.b32.xlu0 %v1022, 44
        %v1043 = vpop.permute.xlu0 %1042
        %1044 = vrot.lane.b32.xlu0 %v1023, 44
        %v1045 = vpop.permute.xlu0 %1044
        %1046 = vrot.lane.b32.xlu0 %v1024, 44
        %v1047 = vpop.permute.xlu0 %1046
        %1048 = vrot.lane.b32.xlu0 %v1025, 44
        %v1049 = vpop.permute.xlu0 %1048
        %1050 = vrot.lane.b32.xlu0 %v1026, 44
        %v1051 = vpop.permute.xlu0 %1050
        %1052 = vrot.lane.b32.xlu0 %v1030, 44
        %v1053 = vpop.permute.xlu0 %1052
        %1054 = vrot.lane.b32.xlu0 %v1031, 44
        %v1055 = vpop.permute.xlu0 %1054
        %1056 = vrot.lane.b32.xlu0 %v1032, 44
        %v1057 = vpop.permute.xlu0 %1056
        %1058 = vrot.lane.b32.xlu0 %v1033, 44
        %v1059 = vpop.permute.xlu0 %1058
        %1060 = vrot.lane.b32.xlu0 %v1034, 44
        %v1061 = vpop.permute.xlu0 %1060
        %1062 = vrot.lane.b32.xlu0 %v1035, 44
        %v1063 = vpop.permute.xlu0 %1062
        %vm1064 = vcmask 359424
        %v1065 = vsel %vm1064, %v1037, %v1039
        %v1066 = vsel %vm1064, %v1039, %v1041
        %v1067 = vsel %vm1064, %v1041, %v1043
        %v1068 = vsel %vm1064, %v1043, %v1045
        %v1069 = vsel %vm1064, %v1045, %v1047
        %v1070 = vsel %vm1064, %v1047, %v1049
        %v1071 = vsel %vm1064, %v1049, %v1051
        %v1072 = vsel %vm1064, %v1051, %v1053
        %v1073 = vsel %vm1064, %v1053, %v1055
        %v1074 = vsel %vm1064, %v1055, %v1057
        %v1075 = vsel %vm1064, %v1057, %v1059
        %v1076 = vsel %vm1064, %v1059, %v1061
        %v1077 = vsel %vm1064, %v1061, %v1063
        %1091 = vst [vmem:[#allocation2 + $0x1a0] sm:$0xf] %v1065
        %1092 = vst [vmem:[#allocation2 + $0x1a8] sm:$0xf] %v1066
        %1093 = vst [vmem:[#allocation2 + $0x1b0] sm:$0xf] %v1067
        %1094 = vst [vmem:[#allocation2 + $0x1b8] sm:$0xf] %v1068
        %1095 = vst [vmem:[#allocation2 + $0x1c0] sm:$0xf] %v1069
        %1096 = vst [vmem:[#allocation2 + $0x1c8] sm:$0xf] %v1070
        %1097 = vst [vmem:[#allocation2 + $0x1d0] sm:$0xf] %v1071
        %1098 = vst [vmem:[#allocation2 + $0x1d8] sm:$0xf] %v1072
        %1099 = vst [vmem:[#allocation2 + $0x1e0] sm:$0xf] %v1073
        %1100 = vst [vmem:[#allocation2 + $0x1e8] sm:$0xf] %v1074
        %1101 = vst [vmem:[#allocation2 + $0x1f0] sm:$0xf] %v1075
        %1102 = vst [vmem:[#allocation2 + $0x1f8] sm:$0xf] %v1076
        %1103 = vst [vmem:[#allocation2 + $0x200] sm:$0xf] %v1077
        %v1104 = vld [vmem:[%s0] sm:$0xff]
        %v1105 = vld [vmem:[#allocation2] sm:$0xff]
        %v1106 = vld [vmem:[#allocation2 + $0x8] sm:$0xff]
        %v1107 = vld [vmem:[#allocation2 + $0x10] sm:$0xff]
        %v1108 = vld [vmem:[#allocation2 + $0x18] sm:$0xff]
        %v1109 = vld [vmem:[#allocation2 + $0x20] sm:$0xff]
        %v1110 = vld [vmem:[#allocation2 + $0x28] sm:$0xff]
        %v1111 = vld [vmem:[#allocation2 + $0x30] sm:$0xff]
        %v1112 = vld [vmem:[#allocation2 + $0x38] sm:$0xff]
        %v1113 = vld [vmem:[#allocation2 + $0x40] sm:$0xff]
        %v1114 = vld [vmem:[#allocation2 + $0x48] sm:$0xff]
        %v1115 = vld [vmem:[#allocation2 + $0x50] sm:$0xff]
        %v1116 = vld [vmem:[#allocation2 + $0x58] sm:$0xff]
        %v1117 = vld [vmem:[#allocation2 + $0x60] sm:$0xff]
        %v1118 = vld [vmem:[#allocation2 + $0x68] sm:$0xff]
        %v1119 = vld [vmem:[#allocation2 + $0x70] sm:$0xff]
        %v1120 = vld [vmem:[#allocation2 + $0x78] sm:$0xff]
        %v1121 = vld [vmem:[#allocation2 + $0x80] sm:$0xff]
        %v1122 = vld [vmem:[#allocation2 + $0x88] sm:$0xff]
        %v1123 = vld [vmem:[#allocation2 + $0x90] sm:$0xff]
        %v1124 = vld [vmem:[#allocation2 + $0x98] sm:$0xff]
        %v1125 = vld [vmem:[#allocation2 + $0xa0] sm:$0xff]
        %v1126 = vld [vmem:[#allocation2 + $0xa8] sm:$0xff]
        %v1127 = vld [vmem:[#allocation2 + $0xb0] sm:$0xff]
        %v1128 = vld [vmem:[#allocation2 + $0xb8] sm:$0xff]
        %v1129 = vld [vmem:[#allocation2 + $0xc0] sm:$0xff]
        %v1130 = vld [vmem:[#allocation2 + $0xc8] sm:$0xff]
        %v1131 = vld [vmem:[#allocation2 + $0xd0] sm:$0xff]
        %v1132 = vld [vmem:[#allocation2 + $0xd8] sm:$0xff]
        %v1133 = vld [vmem:[#allocation2 + $0xe0] sm:$0xff]
        %v1134 = vld [vmem:[#allocation2 + $0xe8] sm:$0xff]
        %v1135 = vld [vmem:[#allocation2 + $0xf0] sm:$0xff]
        %v1136 = vld [vmem:[#allocation2 + $0xf8] sm:$0xff]
        %v1137 = vld [vmem:[#allocation2 + $0x100] sm:$0xff]
        %v1138 = vld [vmem:[#allocation2 + $0x108] sm:$0xff]
        %v1139 = vld [vmem:[#allocation2 + $0x110] sm:$0xff]
        %v1140 = vld [vmem:[#allocation2 + $0x118] sm:$0xff]
        %v1141 = vld [vmem:[#allocation2 + $0x120] sm:$0xff]
        %v1142 = vld [vmem:[#allocation2 + $0x128] sm:$0xff]
        %v1143 = vld [vmem:[#allocation2 + $0x130] sm:$0xff]
        %v1144 = vld [vmem:[#allocation2 + $0x138] sm:$0xff]
        %v1145 = vld [vmem:[#allocation2 + $0x140] sm:$0xff]
        %v1146 = vld [vmem:[#allocation2 + $0x148] sm:$0xff]
        %v1147 = vld [vmem:[#allocation2 + $0x150] sm:$0xff]
        %v1148 = vld [vmem:[#allocation2 + $0x158] sm:$0xff]
        %v1149 = vld [vmem:[#allocation2 + $0x160] sm:$0xff]
        %v1150 = vld [vmem:[#allocation2 + $0x168] sm:$0xff]
        %v1151 = vld [vmem:[#allocation2 + $0x170] sm:$0xff]
        %v1152 = vld [vmem:[#allocation2 + $0x178] sm:$0xff]
        %v1153 = vld [vmem:[#allocation2 + $0x180] sm:$0xff]
        %v1154 = vld [vmem:[#allocation2 + $0x188] sm:$0xff]
        %v1155 = vld [vmem:[#allocation2 + $0x190] sm:$0xff]
        %v1156 = vld [vmem:[#allocation2 + $0x198] sm:$0xff]
        %v1157 = vld [vmem:[#allocation2 + $0x1a0] sm:$0xf]
        %v1158 = vld [vmem:[#allocation2 + $0x1a8] sm:$0xf]
        %v1159 = vld [vmem:[#allocation2 + $0x1b0] sm:$0xf]
        %v1160 = vld [vmem:[#allocation2 + $0x1b8] sm:$0xf]
        %v1161 = vld [vmem:[#allocation2 + $0x1c0] sm:$0xf]
        %v1162 = vld [vmem:[#allocation2 + $0x1c8] sm:$0xf]
        %v1163 = vld [vmem:[#allocation2 + $0x1d0] sm:$0xf]
        %v1164 = vld [vmem:[#allocation2 + $0x1d8] sm:$0xf]
        %v1165 = vld [vmem:[#allocation2 + $0x1e0] sm:$0xf]
        %v1166 = vld [vmem:[#allocation2 + $0x1e8] sm:$0xf]
        %v1167 = vld [vmem:[#allocation2 + $0x1f0] sm:$0xf]
        %v1168 = vld [vmem:[#allocation2 + $0x1f8] sm:$0xf]
        %v1169 = vld [vmem:[#allocation2 + $0x200] sm:$0xf]
        %v1170 = vld [vmem:[%s1] sm:$0xff]
        %1172 = vset.pattern.permute.xlu0 0
        %1173 = vperm.xlu0 %1172, %v1170
        %v1174 = vpop.permute.xlu0 %1173
        %vm1176 = vcmask 293888
        %v1178 = vsel %vm1176, %v1104, 0
        %vm1180 = vcmask 1043456
        %v1182 = vsel %vm1180, %v1157, 0
        %v1185 = vsel %vm1180, %v1158, 0
        %v1188 = vsel %vm1180, %v1159, 0
        %v1191 = vsel %vm1180, %v1160, 0
        %v1194 = vsel %vm1180, %v1161, 0
        %v1197 = vsel %vm1180, %v1162, 0
        %v1200 = vsel %vm1180, %v1163, 0
        %v1203 = vsel %vm1180, %v1164, 0
        %v1206 = vsel %vm1180, %v1165, 0
        %v1209 = vsel %vm1180, %v1166, 0
        %v1212 = vsel %vm1180, %v1167, 0
        %v1215 = vsel %vm1180, %v1168, 0
        %v1218 = vsel %vm1180, %v1169, 0
        %1220 = vmatpush.msra.mxu0 0.0
        %1221 = vmatpush.msra.mxu0 0.0
        %1222 = vmatpush.msra.mxu0 0.0
        %1223 = vmatpush.msra.mxu0 0.0
        %1224 = vmatpush.msra.mxu0 0.0
        %1225 = vmatpush.msra.mxu0 0.0
        %1226 = vmatpush.msra.mxu0 0.0
        %1227 = vmatpush.msra.mxu0 0.0
        %1228 = vmatpush.msra.mxu0 0.0
        %1229 = vmatpush.msra.mxu0 0.0
        %1230 = vmatpush.msra.mxu0 0.0
        %1231 = vmatpush.msra.mxu0 %v1182
        %1232 = vmatpush.msra.mxu0 %v1144
        %1233 = vmatpush.msra.mxu0 %v1131
        %1234 = vmatpush.msra.mxu0 %v1118
        %1235 = vmatpush.msra.mxu0 %v1105
        %1236 = vmatmul.f32.gmra.mxu0 %v1178
        %v1237 = vpop.f32.mrf.mxu0
        %v1238 = vadd.f32 %v1174, %v1237
        %1239 = vdwg.mxu0
        %1240 = vmatpush.msra.mxu0 0.0
        %1241 = vmatpush.msra.mxu0 0.0
        %1242 = vmatpush.msra.mxu0 0.0
        %1243 = vmatpush.msra.mxu0 0.0
        %1244 = vmatpush.msra.mxu0 0.0
        %1245 = vmatpush.msra.mxu0 0.0
        %1246 = vmatpush.msra.mxu0 0.0
        %1247 = vmatpush.msra.mxu0 0.0
        %1248 = vmatpush.msra.mxu0 0.0
        %1249 = vmatpush.msra.mxu0 0.0
        %1250 = vmatpush.msra.mxu0 0.0
        %1251 = vmatpush.msra.mxu0 %v1185
        %1252 = vmatpush.msra.mxu0 %v1145
        %1253 = vmatpush.msra.mxu0 %v1132
        %1254 = vmatpush.msra.mxu0 %v1119
        %1255 = vmatpush.msra.mxu0 %v1106
        %1256 = vmatmul.f32.gmra.mxu0 %v1178
        %v1257 = vpop.f32.mrf.mxu0
        %v1258 = vadd.f32 %v1174, %v1257
        %1259 = vdwg.mxu0
        %1260 = vmatpush.msra.mxu0 0.0
        %1261 = vmatpush.msra.mxu0 0.0
        %1262 = vmatpush.msra.mxu0 0.0
        %1263 = vmatpush.msra.mxu0 0.0
        %1264 = vmatpush.msra.mxu0 0.0
        %1265 = vmatpush.msra.mxu0 0.0
        %1266 = vmatpush.msra.mxu0 0.0
        %1267 = vmatpush.msra.mxu0 0.0
        %1268 = vmatpush.msra.mxu0 0.0
        %1269 = vmatpush.msra.mxu0 0.0
        %1270 = vmatpush.msra.mxu0 0.0
        %1271 = vmatpush.msra.mxu0 %v1188
        %1272 = vmatpush.msra.mxu0 %v1146
        %1273 = vmatpush.msra.mxu0 %v1133
        %1274 = vmatpush.msra.mxu0 %v1120
        %1275 = vmatpush.msra.mxu0 %v1107
        %1276 = vmatmul.f32.gmra.mxu0 %v1178
        %v1277 = vpop.f32.mrf.mxu0
        %v1278 = vadd.f32 %v1174, %v1277
        %1279 = vdwg.mxu0
        %1280 = vmatpush.msra.mxu0 0.0
        %1281 = vmatpush.msra.mxu0 0.0
        %1282 = vmatpush.msra.mxu0 0.0
        %1283 = vmatpush.msra.mxu0 0.0
        %1284 = vmatpush.msra.mxu0 0.0
        %1285 = vmatpush.msra.mxu0 0.0
        %1286 = vmatpush.msra.mxu0 0.0
        %1287 = vmatpush.msra.mxu0 0.0
        %1288 = vmatpush.msra.mxu0 0.0
        %1289 = vmatpush.msra.mxu0 0.0
        %1290 = vmatpush.msra.mxu0 0.0
        %1291 = vmatpush.msra.mxu0 %v1191
        %1292 = vmatpush.msra.mxu0 %v1147
        %1293 = vmatpush.msra.mxu0 %v1134
        %1294 = vmatpush.msra.mxu0 %v1121
        %1295 = vmatpush.msra.mxu0 %v1108
        %1296 = vmatmul.f32.gmra.mxu0 %v1178
        %v1297 = vpop.f32.mrf.mxu0
        %v1298 = vadd.f32 %v1174, %v1297
        %1299 = vdwg.mxu0
        %1300 = vmatpush.msra.mxu0 0.0
        %1301 = vmatpush.msra.mxu0 0.0
        %1302 = vmatpush.msra.mxu0 0.0
        %1303 = vmatpush.msra.mxu0 0.0
        %1304 = vmatpush.msra.mxu0 0.0
        %1305 = vmatpush.msra.mxu0 0.0
        %1306 = vmatpush.msra.mxu0 0.0
        %1307 = vmatpush.msra.mxu0 0.0
        %1308 = vmatpush.msra.mxu0 0.0
        %1309 = vmatpush.msra.mxu0 0.0
        %1310 = vmatpush.msra.mxu0 0.0
        %1311 = vmatpush.msra.mxu0 %v1194
        %1312 = vmatpush.msra.mxu0 %v1148
        %1313 = vmatpush.msra.mxu0 %v1135
        %1314 = vmatpush.msra.mxu0 %v1122
        %1315 = vmatpush.msra.mxu0 %v1109
        %1316 = vmatmul.f32.gmra.mxu0 %v1178
        %v1317 = vpop.f32.mrf.mxu0
        %v1318 = vadd.f32 %v1174, %v1317
        %1319 = vdwg.mxu0
        %1320 = vmatpush.msra.mxu0 0.0
        %1321 = vmatpush.msra.mxu0 0.0
        %1322 = vmatpush.msra.mxu0 0.0
        %1323 = vmatpush.msra.mxu0 0.0
        %1324 = vmatpush.msra.mxu0 0.0
        %1325 = vmatpush.msra.mxu0 0.0
        %1326 = vmatpush.msra.mxu0 0.0
        %1327 = vmatpush.msra.mxu0 0.0
        %1328 = vmatpush.msra.mxu0 0.0
        %1329 = vmatpush.msra.mxu0 0.0
        %1330 = vmatpush.msra.mxu0 0.0
        %1331 = vmatpush.msra.mxu0 %v1197
        %1332 = vmatpush.msra.mxu0 %v1149
        %1333 = vmatpush.msra.mxu0 %v1136
        %1334 = vmatpush.msra.mxu0 %v1123
        %1335 = vmatpush.msra.mxu0 %v1110
        %1336 = vmatmul.f32.gmra.mxu0 %v1178
        %v1337 = vpop.f32.mrf.mxu0
        %v1338 = vadd.f32 %v1174, %v1337
        %1339 = vdwg.mxu0
        %1340 = vmatpush.msra.mxu0 0.0
        %1341 = vmatpush.msra.mxu0 0.0
        %1342 = vmatpush.msra.mxu0 0.0
        %1343 = vmatpush.msra.mxu0 0.0
        %1344 = vmatpush.msra.mxu0 0.0
        %1345 = vmatpush.msra.mxu0 0.0
        %1346 = vmatpush.msra.mxu0 0.0
        %1347 = vmatpush.msra.mxu0 0.0
        %1348 = vmatpush.msra.mxu0 0.0
        %1349 = vmatpush.msra.mxu0 0.0
        %1350 = vmatpush.msra.mxu0 0.0
        %1351 = vmatpush.msra.mxu0 %v1200
        %1352 = vmatpush.msra.mxu0 %v1150
        %1353 = vmatpush.msra.mxu0 %v1137
        %1354 = vmatpush.msra.mxu0 %v1124
        %1355 = vmatpush.msra.mxu0 %v1111
        %1356 = vmatmul.f32.gmra.mxu0 %v1178
        %v1357 = vpop.f32.mrf.mxu0
        %v1358 = vadd.f32 %v1174, %v1357
        %1359 = vdwg.mxu0
        %1360 = vmatpush.msra.mxu0 0.0
        %1361 = vmatpush.msra.mxu0 0.0
        %1362 = vmatpush.msra.mxu0 0.0
        %1363 = vmatpush.msra.mxu0 0.0
        %1364 = vmatpush.msra.mxu0 0.0
        %1365 = vmatpush.msra.mxu0 0.0
        %1366 = vmatpush.msra.mxu0 0.0
        %1367 = vmatpush.msra.mxu0 0.0
        %1368 = vmatpush.msra.mxu0 0.0
        %1369 = vmatpush.msra.mxu0 0.0
        %1370 = vmatpush.msra.mxu0 0.0
        %1371 = vmatpush.msra.mxu0 %v1203
        %1372 = vmatpush.msra.mxu0 %v1151
        %1373 = vmatpush.msra.mxu0 %v1138
        %1374 = vmatpush.msra.mxu0 %v1125
        %1375 = vmatpush.msra.mxu0 %v1112
        %1376 = vmatmul.f32.gmra.mxu0 %v1178
        %v1377 = vpop.f32.mrf.mxu0
        %v1378 = vadd.f32 %v1174, %v1377
        %1379 = vdwg.mxu0
        %1380 = vmatpush.msra.mxu0 0.0
        %1381 = vmatpush.msra.mxu0 0.0
        %1382 = vmatpush.msra.mxu0 0.0
        %1383 = vmatpush.msra.mxu0 0.0
        %1384 = vmatpush.msra.mxu0 0.0
        %1385 = vmatpush.msra.mxu0 0.0
        %1386 = vmatpush.msra.mxu0 0.0
        %1387 = vmatpush.msra.mxu0 0.0
        %1388 = vmatpush.msra.mxu0 0.0
        %1389 = vmatpush.msra.mxu0 0.0
        %1390 = vmatpush.msra.mxu0 0.0
        %1391 = vmatpush.msra.mxu0 %v1206
        %1392 = vmatpush.msra.mxu0 %v1152
        %1393 = vmatpush.msra.mxu0 %v1139
        %1394 = vmatpush.msra.mxu0 %v1126
        %1395 = vmatpush.msra.mxu0 %v1113
        %1396 = vmatmul.f32.gmra.mxu0 %v1178
        %v1397 = vpop.f32.mrf.mxu0
        %v1398 = vadd.f32 %v1174, %v1397
        %1399 = vdwg.mxu0
        %1400 = vmatpush.msra.mxu0 0.0
        %1401 = vmatpush.msra.mxu0 0.0
        %1402 = vmatpush.msra.mxu0 0.0
        %1403 = vmatpush.msra.mxu0 0.0
        %1404 = vmatpush.msra.mxu0 0.0
        %1405 = vmatpush.msra.mxu0 0.0
        %1406 = vmatpush.msra.mxu0 0.0
        %1407 = vmatpush.msra.mxu0 0.0
        %1408 = vmatpush.msra.mxu0 0.0
        %1409 = vmatpush.msra.mxu0 0.0
        %1410 = vmatpush.msra.mxu0 0.0
        %1411 = vmatpush.msra.mxu0 %v1209
        %1412 = vmatpush.msra.mxu0 %v1153
        %1413 = vmatpush.msra.mxu0 %v1140
        %1414 = vmatpush.msra.mxu0 %v1127
        %1415 = vmatpush.msra.mxu0 %v1114
        %1416 = vmatmul.f32.gmra.mxu0 %v1178
        %v1417 = vpop.f32.mrf.mxu0
        %v1418 = vadd.f32 %v1174, %v1417
        %1419 = vdwg.mxu0
        %1420 = vmatpush.msra.mxu0 0.0
        %1421 = vmatpush.msra.mxu0 0.0
        %1422 = vmatpush.msra.mxu0 0.0
        %1423 = vmatpush.msra.mxu0 0.0
        %1424 = vmatpush.msra.mxu0 0.0
        %1425 = vmatpush.msra.mxu0 0.0
        %1426 = vmatpush.msra.mxu0 0.0
        %1427 = vmatpush.msra.mxu0 0.0
        %1428 = vmatpush.msra.mxu0 0.0
        %1429 = vmatpush.msra.mxu0 0.0
        %1430 = vmatpush.msra.mxu0 0.0
        %1431 = vmatpush.msra.mxu0 %v1212
        %1432 = vmatpush.msra.mxu0 %v1154
        %1433 = vmatpush.msra.mxu0 %v1141
        %1434 = vmatpush.msra.mxu0 %v1128
        %1435 = vmatpush.msra.mxu0 %v1115
        %1436 = vmatmul.f32.gmra.mxu0 %v1178
        %v1437 = vpop.f32.mrf.mxu0
        %v1438 = vadd.f32 %v1174, %v1437
        %1439 = vdwg.mxu0
        %1440 = vmatpush.msra.mxu0 0.0
        %1441 = vmatpush.msra.mxu0 0.0
        %1442 = vmatpush.msra.mxu0 0.0
        %1443 = vmatpush.msra.mxu0 0.0
        %1444 = vmatpush.msra.mxu0 0.0
        %1445 = vmatpush.msra.mxu0 0.0
        %1446 = vmatpush.msra.mxu0 0.0
        %1447 = vmatpush.msra.mxu0 0.0
        %1448 = vmatpush.msra.mxu0 0.0
        %1449 = vmatpush.msra.mxu0 0.0
        %1450 = vmatpush.msra.mxu0 0.0
        %1451 = vmatpush.msra.mxu0 %v1215
        %1452 = vmatpush.msra.mxu0 %v1155
        %1453 = vmatpush.msra.mxu0 %v1142
        %1454 = vmatpush.msra.mxu0 %v1129
        %1455 = vmatpush.msra.mxu0 %v1116
        %1456 = vmatmul.f32.gmra.mxu0 %v1178
        %v1457 = vpop.f32.mrf.mxu0
        %v1458 = vadd.f32 %v1174, %v1457
        %1459 = vdwg.mxu0
        %1460 = vmatpush.msra.mxu0 0.0
        %1461 = vmatpush.msra.mxu0 0.0
        %1462 = vmatpush.msra.mxu0 0.0
        %1463 = vmatpush.msra.mxu0 0.0
        %1464 = vmatpush.msra.mxu0 0.0
        %1465 = vmatpush.msra.mxu0 0.0
        %1466 = vmatpush.msra.mxu0 0.0
        %1467 = vmatpush.msra.mxu0 0.0
        %1468 = vmatpush.msra.mxu0 0.0
        %1469 = vmatpush.msra.mxu0 0.0
        %1470 = vmatpush.msra.mxu0 0.0
        %1471 = vmatpush.msra.mxu0 %v1218
        %1472 = vmatpush.msra.mxu0 %v1156
        %1473 = vmatpush.msra.mxu0 %v1143
        %1474 = vmatpush.msra.mxu0 %v1130
        %1475 = vmatpush.msra.mxu0 %v1117
        %1476 = vmatmul.f32.gmra.mxu0 %v1178
        %v1477 = vpop.f32.mrf.mxu0
        %v1478 = vadd.f32 %v1174, %v1477
        %1479 = vdwg.mxu0
        %1480 = vst [vmem:[%s188] sm:$0xff] %v1238
        %1481 = vst [vmem:[%s188 + $0x8] sm:$0xff] %v1258
        %1482 = vst [vmem:[%s188 + $0x10] sm:$0xff] %v1278
        %1483 = vst [vmem:[%s188 + $0x18] sm:$0xff] %v1298
        %1484 = vst [vmem:[%s188 + $0x20] sm:$0xff] %v1318
        %1485 = vst [vmem:[%s188 + $0x28] sm:$0xff] %v1338
        %1486 = vst [vmem:[%s188 + $0x30] sm:$0xff] %v1358
        %1487 = vst [vmem:[%s188 + $0x38] sm:$0xff] %v1378
        %1488 = vst [vmem:[%s188 + $0x40] sm:$0xff] %v1398
        %1489 = vst [vmem:[%s188 + $0x48] sm:$0xff] %v1418
        %1490 = vst [vmem:[%s188 + $0x50] sm:$0xff] %v1438
        %1491 = vst [vmem:[%s188 + $0x58] sm:$0xff] %v1458
        %1492 = vst [vmem:[%s188 + $0x60] sm:$0xff] %v1478
        %s1493 = sand.u32 %s96, 1
        %s1494 = scalar_lea.sflag [#allocation5], %s1493
        %s1495 = sand.u32 %s96, 1
        %s1496 = smul.addr %s1495, 104
        %s1497 = scalar_lea.vmem [#allocation6], %s1496
        // Predicated region
        $region37: #{tpu_custom_call.1} parent=31 // pred_check
          %p1498 = pneg %p106
        $region38: #{tpu_custom_call.1} parent=31 // pred_check_branch
          %1500 = sbr.rel (%p1498) target = $region40
        $region39: #{tpu_custom_call.1} parent=31 // pred_region
          %1502 = vsyncadd %s1494, 0
          %s1503 = smul.addr %s20, 13
          %s1504 = smul.addr %s1503, 8
          %s1505 = scalar_lea.hbm %s3, %s1504
          %s1507 = sshll.u32 %s1497, 4
          %s1508 = int_to_ptr.vmem [resolvable:$true] %s1507
          %s1509 = sshll.u32 %s1505, 4
          %s1510 = int_to_ptr.hbm [resolvable:$true] %s1509
          %1512 = dma.vmem_to_hbm [thread:$0]  %s1508, 1664, %s1510, %s1494
        $region40: #{tpu_custom_call.1} parent=31 // pred_fallthru
          _
      $region32: #{tpu_custom_call.1} parent=5 // pred_fallthru
        _
      %p1513 = scmp.le.s32.totalorder 2, %s15
      // Predicated region
      $region41: #{tpu_custom_call.1} parent=5 // pred_check
        %p1514 = pneg %p1513
      $region42: #{tpu_custom_call.1} parent=5 // pred_check_branch
        %1516 = sbr.rel (%p1514) target = $region44
      $region43: #{tpu_custom_call.1} parent=5 // pred_region
        %s1517 = ssub.s32 %s15, 2
        // Predicated region
        $region45: #{tpu_custom_call.1} parent=43 // pred_check
          %p1518 = pneg %p112
        $region46: #{tpu_custom_call.1} parent=43 // pred_check_branch
          %1520 = sbr.rel (%p1518) target = $region48
        $region47: #{tpu_custom_call.1} parent=43 // pred_region
          %s1521 = sand.u32 %s97, 1
          %s1522 = scalar_lea.sflag [#allocation5], %s1521
          %s1523 = sand.u32 %s97, 1
          %s1524 = smul.addr %s1523, 104
          %s1525 = scalar_lea.vmem [#allocation6], %s1524
          %1527 = dma.done %s1522, 1664
        $region48: #{tpu_custom_call.1} parent=43 // pred_fallthru
          _
      $region44: #{tpu_custom_call.1} parent=5 // pred_fallthru
        _
    $region6: #{tpu_custom_call.1} parent=1 // loop_footer
      %s19 = sadd.s32 1, %s15
    $region7: #{tpu_custom_call.1} parent=1 // loop_footer_branch
      %14 = sbr.rel target = $region3
    $region8: #{tpu_custom_call.1} parent=1 // loop_exit
      _
    %1528 = vsyncpa [#allocation4], 1
    %s1529 = scalar_lea.sflag [#allocation4], 1
    %1530 = vsyncpa %s1529, 1
    %1531 = vsyncpa [#allocation5], 1
    %s1532 = scalar_lea.sflag [#allocation5], 1
    %1533 = vsyncpa %s1532, 1

</llo_original>
